<compile_context>
chip_gen: v7x
topology: tpu7x:2x2x1
jax: 0.10.0
libtpu: 0.0.40
codegen_flags: <defaults>
</compile_context>

<pallas_src>
import functools

import jax
import jax.numpy as jnp
from jax.experimental import pallas as pl
from jax.experimental.pallas import tpu as pltpu


def _round_up(a: int, b: int) -> int:
    return (a + b - 1) // b * b


def _vq_kernel(x_ref, w_bf_ref, w_kd_ref, e2_ref,
               q_ref, ind_ref, pcs_ref, pls_ref,
               *, n_embed: int, total_rows: int):
    x = x_ref[...]                                              # (T, D) f32
    tile_rows = x.shape[0]

    # Distance matmul on the MXU in bf16 (f32 accumulation).  ||x||^2 is a
    # per-row constant and is dropped: argmin over k is unchanged.
    xw = jnp.dot(x.astype(jnp.bfloat16), w_bf_ref[...],
                 preferred_element_type=jnp.float32)            # (T, K)
    dist = e2_ref[...] - 2.0 * xw                               # (T, K)

    # argmin over the codebook axis, first-occurrence tie-break (torch .max).
    min_d = jnp.min(dist, axis=1, keepdims=True)                # (T, 1)
    ids = jax.lax.broadcasted_iota(jnp.int32, dist.shape, 1)    # (T, K)
    ind = jnp.min(jnp.where(dist == min_d, ids, n_embed),
                  axis=1, keepdims=True)                        # (T, 1)
    ind_ref[...] = ind

    # Mask rows that are padding (beyond the original batch size).
    row0 = pl.program_id(0) * tile_rows
    rows = jax.lax.broadcasted_iota(jnp.int32, (tile_rows, 1), 0) + row0
    valid = (rows < total_rows).astype(jnp.float32)             # (T, 1)

    # One-hot (masked) codebook lookup as an MXU matmul against E^T (K, D),
    # in f32 so quantize is bit-exact codebook rows.
    onehot = jnp.where(ids == ind, valid, 0.0)                  # (T, K)
    quant = jnp.dot(onehot, w_kd_ref[...],
                    preferred_element_type=jnp.float32)         # (T, D)
    q_ref[...] = quant.astype(q_ref.dtype)

    # Per-tile partials (lane-dense blocks); padded rows contribute zero.
    diff = quant - x                                            # (T, D)
    loss_part = jnp.sum(diff * diff, axis=0, keepdims=True)     # (1, D)
    pls_ref[...] = jnp.broadcast_to(loss_part, pls_ref.shape)   # (1, 8, D)

    colsum = jnp.sum(onehot, axis=0, keepdims=True)             # (1, K)
    pcs_ref[...] = jnp.broadcast_to(colsum, pcs_ref.shape)      # (1, 8, K)


def quantization_forward(x, embed, cluster_size, *, decay=0.99, eps=1e-5,
                         tile_b=256):
    """Fused VQ forward. x:(B,D), embed:(D,K), cluster_size:(K,).

    Returns (quantize, quant_loss, n_small_clusters, embed_ind,
             new_cluster_size) -- new_cluster_size is the functional version
    of the PyTorch in-place buffer update.
    """
    del eps  # only used by the training-mode codebook renormalization
    batch, dim = x.shape
    dim_w, n_embed = embed.shape
    assert dim == dim_w

    # Tile over the token axis; pad to a multiple of the tile size.
    tile_b = _round_up(max(8, min(int(tile_b), _round_up(batch, 8))), 8)
    batch_p = _round_up(batch, tile_b)
    num_tiles = batch_p // tile_b
    x_p = x if batch_p == batch else jnp.pad(x, ((0, batch_p - batch), (0, 0)))

    # Hoisted, grid-invariant codebook operands (DMA'd once).
    embed_f32 = embed.astype(jnp.float32)
    e2 = jnp.sum(embed_f32 * embed_f32, axis=0, keepdims=True)   # (1, K) f32
    embed_bf = embed_f32.astype(jnp.bfloat16)                    # (D, K) bf16
    embed_kd = jnp.transpose(embed_f32)                          # (K, D) f32

    kernel = functools.partial(_vq_kernel, n_embed=int(n_embed),
                               total_rows=int(batch))

    flops = 4 * batch_p * dim * n_embed   # two MXU matmuls dominate
    bytes_accessed = (4 * 2 * batch_p * dim + 2 * dim * n_embed
                      + 4 * dim * n_embed + 4 * n_embed + 4 * batch_p
                      + 4 * num_tiles * 8 * (n_embed + dim))

    quant_p, ind_p, part_cs, part_loss = pl.pallas_call(
        kernel,
        grid=(num_tiles,),
        in_specs=[
            pl.BlockSpec((tile_b, dim), lambda i: (i, 0)),       # x tile
            pl.BlockSpec((dim, n_embed), lambda i: (0, 0)),      # E   (bf16)
            pl.BlockSpec((n_embed, dim), lambda i: (0, 0)),      # E^T (f32)
            pl.BlockSpec((1, n_embed), lambda i: (0, 0)),        # ||E||^2
        ],
        out_specs=(
            pl.BlockSpec((tile_b, dim), lambda i: (i, 0)),       # quantize
            pl.BlockSpec((tile_b, 1), lambda i: (i, 0)),         # embed_ind
            pl.BlockSpec((1, 8, n_embed), lambda i: (i, 0, 0)),  # onehot sums
            pl.BlockSpec((1, 8, dim), lambda i: (i, 0, 0)),      # loss parts
        ),
        out_shape=(
            jax.ShapeDtypeStruct((batch_p, dim), x.dtype),
            jax.ShapeDtypeStruct((batch_p, 1), jnp.int32),
            jax.ShapeDtypeStruct((num_tiles, 8, n_embed), jnp.float32),
            jax.ShapeDtypeStruct((num_tiles, 8, dim), jnp.float32),
        ),
        compiler_params=pltpu.CompilerParams(
            dimension_semantics=("parallel",)),
        cost_estimate=pl.CostEstimate(flops=flops, transcendentals=0,
                                      bytes_accessed=bytes_accessed),
    )(x_p, embed_bf, embed_kd, e2)

    # Tiny O(num_tiles * K) finish: reductions + EMA buffer update + count.
    quant = quant_p[:batch]
    embed_ind = ind_p[:batch, 0]
    quant_loss = part_loss[:, 0, :].sum() / (batch * dim)
    onehot_sum = part_cs[:, 0, :].sum(axis=0)                    # (K,)
    new_cs = cluster_size.astype(jnp.float32) * decay + onehot_sum * (1.0 - decay)
    n_small = jnp.sum((new_cs < 1.0).astype(jnp.int32))
    return quant, quant_loss, n_small, embed_ind, new_cs


if __name__ == "__main__":
    key = jax.random.PRNGKey(0)
    # Small shapes consistent with the module; lane-dense dims (128 / 256).
    # 300 tokens with tile_b=256 -> 2 grid tiles, exercises padding/masking.
    n_tokens, latent_dimension, code_book_size = 300, 128, 256
    decay = 0.99

    kx, ke, kc = jax.random.split(key, 3)
    x = jax.random.normal(kx, (n_tokens, latent_dimension), dtype=jnp.float32)
    embed = 0.1 * jax.random.normal(
        ke, (latent_dimension, code_book_size), dtype=jnp.float32)
    cluster_size = jax.random.uniform(
        kc, (code_book_size,), jnp.float32, 0.0, 2.0)

    quant, loss, n_small, ind, new_cs = jax.block_until_ready(
        quantization_forward(x, embed, cluster_size, decay=decay))

    # ---- Plain-JAX reference of the same semantics. ----
    dist_r = ((x ** 2).sum(1, keepdims=True) - 2.0 * (x @ embed)
              + (embed ** 2).sum(0, keepdims=True))
    ind_r = jnp.argmin(dist_r, axis=1)

    # The kernel's distance matmul runs in bf16 (f32 accum), so allow benign
    # near-tie flips: every chosen code must attain the per-row minimum
    # distance within bf16-matmul tolerance.
    chosen_d = jnp.take_along_axis(dist_r, ind[:, None], axis=1)[:, 0]
    assert quant.shape == (n_tokens, latent_dimension), quant.shape
    assert ind.shape == (n_tokens,), ind.shape
    assert bool(jnp.all(chosen_d - dist_r.min(axis=1) <= 0.25)), "bad argmin"

    # Downstream of the chosen indices, everything must be (near-)exact.
    quant_r = embed.T[ind]
    loss_r = jnp.mean((quant_r - x) ** 2)
    onehot_sum_r = jax.nn.one_hot(ind, code_book_size, dtype=jnp.float32).sum(0)
    cs_r = cluster_size * decay + onehot_sum_r * (1.0 - decay)

    assert jnp.allclose(quant, quant_r, atol=1e-6, rtol=1e-6)
    assert jnp.allclose(loss, loss_r, atol=1e-5, rtol=1e-5)
    assert jnp.allclose(new_cs, cs_r, atol=1e-5, rtol=1e-5)
    assert int(n_small) == int((cs_r < 1.0).sum())

    print("KERNEL_OK")
</pallas_src>

<mosaic_0001>
module attributes {stable_mosaic.version = 11 : i64} {
  func.func @_vq_kernel(%arg0: i32, %arg1: memref<256x128xf32, #tpu.memory_space<vmem>>, %arg2: memref<128x256xbf16, #tpu.memory_space<vmem>>, %arg3: memref<256x128xf32, #tpu.memory_space<vmem>>, %arg4: memref<1x256xf32, #tpu.memory_space<vmem>>, %arg5: memref<256x128xf32, #tpu.memory_space<vmem>>, %arg6: memref<256x1xi32, #tpu.memory_space<vmem>>, %arg7: memref<1x8x256xf32, #tpu.memory_space<vmem>>, %arg8: memref<1x8x128xf32, #tpu.memory_space<vmem>>) attributes {dimension_semantics = [#tpu.dimension_semantics<parallel>], iteration_bounds = array<i64: 2>, scalar_prefetch = 0 : i64, scratch_operands = 0 : i64, tpu.core_type = #tpu.core_type<tc>, window_params = [{transform_indices = @transform_0, window_bounds = array<i64: 256, 128>}, {pipeline_mode = #tpu.pipeline_mode<synchronous>, transform_indices = @transform_1, window_bounds = array<i64: 128, 256>}, {pipeline_mode = #tpu.pipeline_mode<synchronous>, transform_indices = @transform_2, window_bounds = array<i64: 256, 128>}, {pipeline_mode = #tpu.pipeline_mode<synchronous>, transform_indices = @transform_3, window_bounds = array<i64: 1, 256>}, {transform_indices = @transform_4, window_bounds = array<i64: 256, 128>}, {transform_indices = @transform_5, window_bounds = array<i64: 256, 1>}, {transform_indices = @transform_6, window_bounds = array<i64: 1, 8, 256>}, {transform_indices = @transform_7, window_bounds = array<i64: 1, 8, 128>}]} {
    %c0 = arith.constant 0 : index
    %c0_0 = arith.constant 0 : index
    %0 = vector.load %arg1[%c0, %c0_0] : memref<256x128xf32, #tpu.memory_space<vmem>>, vector<256x128xf32>
    %1 = arith.truncf %0 : vector<256x128xf32> to vector<256x128xbf16>
    %c0_1 = arith.constant 0 : index
    %c0_2 = arith.constant 0 : index
    %2 = vector.load %arg2[%c0_1, %c0_2] : memref<128x256xbf16, #tpu.memory_space<vmem>>, vector<128x256xbf16>
    %cst = arith.constant dense<0.000000e+00> : vector<256x256xf32>
    %3 = tpu.matmul %1, %2, %cst {dimension_numbers = #tpu.dot_dimension_numbers<[1], [0], [0], [1], [0, 0, 1, 1], [], []>} : vector<256x128xbf16>, vector<128x256xbf16>, vector<256x256xf32> -> vector<256x256xf32>
    %c0_3 = arith.constant 0 : index
    %c0_4 = arith.constant 0 : index
    %4 = vector.load %arg4[%c0_3, %c0_4] : memref<1x256xf32, #tpu.memory_space<vmem>>, vector<1x256xf32>
    %cst_5 = arith.constant 2.000000e+00 : f32
    %5 = vector.broadcast %cst_5 : f32 to vector<256x256xf32>
    %6 = arith.mulf %5, %3 : vector<256x256xf32>
    %7 = vector.broadcast %4 : vector<1x256xf32> to vector<256x256xf32>
    %8 = arith.subf %7, %6 : vector<256x256xf32>
    %cst_6 = arith.constant dense<0x7F800000> : vector<256xf32>
    %9 = vector.multi_reduction <minimumf>, %8, %cst_6 [1] : vector<256x256xf32> to vector<256xf32>
    %10 = vector.shape_cast %9 : vector<256xf32> to vector<256x1xf32>
    %11 = tpu.iota {dimensions = array<i32: 1>} : vector<256x256xi32>
    %12 = vector.broadcast %10 : vector<256x1xf32> to vector<256x256xf32>
    %13 = arith.cmpf oeq, %8, %12 : vector<256x256xf32>
    %c256_i32 = arith.constant 256 : i32
    %14 = vector.broadcast %c256_i32 : i32 to vector<256x256xi32>
    %15 = arith.select %13, %11, %14 : vector<256x256xi1>, vector<256x256xi32>
    %cst_7 = arith.constant dense<2147483647> : vector<256xi32>
    %16 = vector.multi_reduction <minsi>, %15, %cst_7 [1] : vector<256x256xi32> to vector<256xi32>
    %17 = vector.shape_cast %16 : vector<256xi32> to vector<256x1xi32>
    %c0_8 = arith.constant 0 : index
    %c0_9 = arith.constant 0 : index
    %18 = vector.load %arg6[%c0_8, %c0_9] : memref<256x1xi32, #tpu.memory_space<vmem>>, vector<256x1xi32>
    tpu.vector_store %arg6[%c0_8, %c0_9], %17 {strides = array<i32>} : memref<256x1xi32, #tpu.memory_space<vmem>>, vector<256x1xi32>,
    %c256_i32_10 = arith.constant 256 : i32
    %19 = arith.muli %arg0, %c256_i32_10 : i32
    %20 = tpu.iota {dimensions = array<i32: 0>} : vector<256x1xi32>
    %21 = vector.broadcast %19 : i32 to vector<256x1xi32>
    %22 = arith.addi %20, %21 : vector<256x1xi32>
    %c300_i32 = arith.constant 300 : i32
    %23 = vector.broadcast %c300_i32 : i32 to vector<256x1xi32>
    %24 = arith.cmpi slt, %22, %23 : vector<256x1xi32>
    %25 = arith.extui %24 : vector<256x1xi1> to vector<256x1xi32>
    %26 = arith.sitofp %25 : vector<256x1xi32> to vector<256x1xf32>
    %27 = vector.broadcast %17 : vector<256x1xi32> to vector<256x256xi32>
    %28 = arith.cmpi eq, %11, %27 : vector<256x256xi32>
    %cst_11 = arith.constant 0.000000e+00 : f32
    %29 = vector.shape_cast %26 : vector<256x1xf32> to vector<256x1xf32>
    %30 = vector.broadcast %29 : vector<256x1xf32> to vector<256x256xf32>
    %31 = vector.broadcast %cst_11 : f32 to vector<256x256xf32>
    %32 = arith.select %28, %30, %31 : vector<256x256xi1>, vector<256x256xf32>
    %c0_12 = arith.constant 0 : index
    %c0_13 = arith.constant 0 : index
    %33 = vector.load %arg3[%c0_12, %c0_13] : memref<256x128xf32, #tpu.memory_space<vmem>>, vector<256x128xf32>
    %cst_14 = arith.constant dense<0.000000e+00> : vector<256x128xf32>
    %34 = tpu.matmul %32, %33, %cst_14 {dimension_numbers = #tpu.dot_dimension_numbers<[1], [0], [0], [1], [0, 0, 1, 1], [], []>} : vector<256x256xf32>, vector<256x128xf32>, vector<256x128xf32> -> vector<256x128xf32>
    %c0_15 = arith.constant 0 : index
    %c0_16 = arith.constant 0 : index
    %35 = vector.load %arg5[%c0_15, %c0_16] : memref<256x128xf32, #tpu.memory_space<vmem>>, vector<256x128xf32>
    tpu.vector_store %arg5[%c0_15, %c0_16], %34 {strides = array<i32>} : memref<256x128xf32, #tpu.memory_space<vmem>>, vector<256x128xf32>,
    %36 = arith.subf %34, %0 : vector<256x128xf32>
    %37 = arith.mulf %36, %36 : vector<256x128xf32>
    %cst_17 = arith.constant dense<0.000000e+00> : vector<128xf32>
    %38 = vector.multi_reduction <add>, %37, %cst_17 [0] : vector<256x128xf32> to vector<128xf32>
    %39 = vector.shape_cast %38 : vector<128xf32> to vector<1x128xf32>
    %40 = vector.shape_cast %39 : vector<1x128xf32> to vector<1x1x128xf32>
    %41 = vector.broadcast %40 : vector<1x1x128xf32> to vector<1x8x128xf32>
    %c0_18 = arith.constant 0 : index
    %c0_19 = arith.constant 0 : index
    %c0_20 = arith.constant 0 : index
    %42 = vector.load %arg8[%c0_18, %c0_19, %c0_20] : memref<1x8x128xf32, #tpu.memory_space<vmem>>, vector<1x8x128xf32>
    tpu.vector_store %arg8[%c0_18, %c0_19, %c0_20], %41 {strides = array<i32>} : memref<1x8x128xf32, #tpu.memory_space<vmem>>, vector<1x8x128xf32>,
    %cst_21 = arith.constant dense<0.000000e+00> : vector<256xf32>
    %43 = vector.multi_reduction <add>, %32, %cst_21 [0] : vector<256x256xf32> to vector<256xf32>
    %44 = vector.shape_cast %43 : vector<256xf32> to vector<1x256xf32>
    %45 = vector.shape_cast %44 : vector<1x256xf32> to vector<1x1x256xf32>
    %46 = vector.broadcast %45 : vector<1x1x256xf32> to vector<1x8x256xf32>
    %c0_22 = arith.constant 0 : index
    %c0_23 = arith.constant 0 : index
    %c0_24 = arith.constant 0 : index
    %47 = vector.load %arg7[%c0_22, %c0_23, %c0_24] : memref<1x8x256xf32, #tpu.memory_space<vmem>>, vector<1x8x256xf32>
    tpu.vector_store %arg7[%c0_22, %c0_23, %c0_24], %46 {strides = array<i32>} : memref<1x8x256xf32, #tpu.memory_space<vmem>>, vector<1x8x256xf32>,
    return
  }
  func.func @transform_0(%arg0: i32) -> (i32, i32) {
    %c0_i32 = arith.constant 0 : i32
    %c0_i32_0 = arith.constant 0 : i32
    return %arg0, %c0_i32 : i32, i32
  }
  func.func @transform_1(%arg0: i32) -> (i32, i32) {
    %c0_i32 = arith.constant 0 : i32
    %c0_i32_0 = arith.constant 0 : i32
    %c0_i32_1 = arith.constant 0 : i32
    return %c0_i32, %c0_i32_0 : i32, i32
  }
  func.func @transform_2(%arg0: i32) -> (i32, i32) {
    %c0_i32 = arith.constant 0 : i32
    %c0_i32_0 = arith.constant 0 : i32
    %c0_i32_1 = arith.constant 0 : i32
    return %c0_i32, %c0_i32_0 : i32, i32
  }
  func.func @transform_3(%arg0: i32) -> (i32, i32) {
    %c0_i32 = arith.constant 0 : i32
    %c0_i32_0 = arith.constant 0 : i32
    %c0_i32_1 = arith.constant 0 : i32
    return %c0_i32, %c0_i32_0 : i32, i32
  }
  func.func @transform_4(%arg0: i32) -> (i32, i32) {
    %c0_i32 = arith.constant 0 : i32
    %c0_i32_0 = arith.constant 0 : i32
    return %arg0, %c0_i32 : i32, i32
  }
  func.func @transform_5(%arg0: i32) -> (i32, i32) {
    %c0_i32 = arith.constant 0 : i32
    %c0_i32_0 = arith.constant 0 : i32
    return %arg0, %c0_i32 : i32, i32
  }
  func.func @transform_6(%arg0: i32) -> (i32, i32, i32) {
    %c0_i32 = arith.constant 0 : i32
    %c0_i32_0 = arith.constant 0 : i32
    %c0_i32_1 = arith.constant 0 : i32
    return %arg0, %c0_i32, %c0_i32_0 : i32, i32, i32
  }
  func.func @transform_7(%arg0: i32) -> (i32, i32, i32) {
    %c0_i32 = arith.constant 0 : i32
    %c0_i32_0 = arith.constant 0 : i32
    %c0_i32_1 = arith.constant 0 : i32
    return %arg0, %c0_i32, %c0_i32_0 : i32, i32, i32
  }
}

</mosaic_0001>

<llo_original>
// kernel: tpu_custom_call.1
$region0: #{tpu_custom_call.1}
  #allocation0 [shape = 'u32[]', space=smem, size = 0x4, offset = 0x4, fixed_abs, tag = 'smem constant byte address 0x4 - core index']
  #allocation1 [shape = 'u32[144,128]{1,0:T(1,128)}', space=vmem, size = 0x12000, scoped, tag = 'internal scratch']
  %s0 = inlined_call_operand.hbm [shape: f32[512,128], index: 0, kind: input, shape index: {}]
  %s1 = inlined_call_operand.hbm [shape: bf16[128,256], index: 1, kind: input, shape index: {}]
  %s2 = inlined_call_operand.hbm [shape: f32[256,128], index: 2, kind: input, shape index: {}]
  %s3 = inlined_call_operand.vmem [shape: f32[1,256], index: 3, kind: input, shape index: {}]
  %s4 = inlined_call_operand.hbm [shape: f32[512,128], index: 4, kind: output, shape index: {0}]
  %s5 = inlined_call_operand.vmem [shape: s32[512,1], index: 5, kind: output, shape index: {1}]
  %s6 = inlined_call_operand.hbm [shape: f32[2,8,256], index: 6, kind: output, shape index: {2}]
  %s7 = inlined_call_operand.hbm [shape: f32[2,8,128], index: 7, kind: output, shape index: {3}]
  %8 = xla_tuple %s4, %s5, %s6, %s7
  %s9 = sld [smem:[#allocation0]]
  $region85: #{tpu_custom_call.1} parent=0
    _
  %s11 = ssub.s32 1, %s9
  %s12 = scalar_select 0, %s11, %s9
  $region1: #{tpu_custom_call.1} parent=0
    #allocation2 [shape = 'u8[262144]{0}', space=vmem, size = 0x40000, scoped, tag = 'input window, operand 0']
    #allocation3 [shape = 's32[2]{0}', space=sflag, size = 0x8, scoped, tag = 'scoped memory for tpu_custom_call.1']
    #allocation4 [shape = 's32[2]{0}', space=sflag, size = 0x8, scoped, tag = 'scoped memory for tpu_custom_call.1']
    #allocation5 [shape = 'u8[65536]{0}', space=vmem, size = 0x10000, scoped, tag = 'input window, operand 1, single buffered']
    #allocation6 [shape = 's32[1]{0}', space=sflag, size = 0x4, scoped, tag = 'scoped memory for tpu_custom_call.1']
    #allocation7 [shape = 'u8[131072]{0}', space=vmem, size = 0x20000, scoped, tag = 'input window, operand 2, single buffered']
    #allocation8 [shape = 'u8[262144]{0}', space=vmem, size = 0x40000, scoped, tag = 'output window, operand 0']
    #allocation9 [shape = 'u8[16384]{0}', space=vmem, size = 0x4000, scoped, tag = 'output window, operand 2']
    #allocation10 [shape = 's32[2]{0}', space=sflag, size = 0x8, scoped, tag = 'scoped memory for tpu_custom_call.1']
    #allocation11 [shape = 'u8[8192]{0}', space=vmem, size = 0x2000, scoped, tag = 'output window, operand 3']
    %13 = vsyncpa [#allocation3], 0
    %s14 = scalar_lea.sflag [#allocation3], 1
    %15 = vsyncpa %s14, 0
    %16 = vsyncpa [#allocation6], 0
    %17 = vsyncpa [#allocation4], 0
    %s18 = scalar_lea.sflag [#allocation4], 1
    %19 = vsyncpa %s18, 0
    %20 = vsyncpa [#allocation10], 0
    %s21 = scalar_lea.sflag [#allocation10], 1
    %22 = vsyncpa %s21, 0
    loop: start=0, step=1, limit=4
    $region2: #{tpu_custom_call.1} parent=1 // loop_pre_header
      _
    $region3: #{tpu_custom_call.1} parent=1 // loop_header
      %s24 = sphi 0, %s28
      %p25 = scmp.ge.s32.totalorder %s24, 4
      %s34 = sphi 0, %s36
      %s37 = sphi 0, %s34
      %s38 = sphi 0, %s37
      %s54 = sphi 0, %s38
      %s58 = sphi 0, %s58
      %s60 = sphi 0, %s58
      %s61 = sphi 0, %s60
      %s75 = sphi 0, %s61
      %s79 = sphi 0, %s79
      %s81 = sphi 0, %s79
      %s82 = sphi 0, %s81
      %s96 = sphi 0, %s82
      %s100 = sphi 0, %s100
      %s102 = sphi 0, %s100
      %s103 = sphi 0, %s102
      %s117 = sphi 0, %s103
      %s123 = sphi 0, %s125
      %s126 = sphi 0, %s123
      %s127 = sphi 0, %s126
      %s143 = sphi 0, %s127
      %s149 = sphi 0, %s151
      %s152 = sphi 0, %s149
      %s153 = sphi 0, %s152
      %s169 = sphi 0, %s153
      %s175 = sphi 0, %s177
      %s178 = sphi 0, %s175
      %s179 = sphi 0, %s178
      %s195 = sphi 0, %s179
      %s201 = sphi 0, %s203
      %s204 = sphi 0, %s201
      %s205 = sphi 0, %s204
      %s221 = sphi 0, %s205
    $region4: #{tpu_custom_call.1} parent=1 // loop_header_branch
      %27 = sbr.rel (%p25) target = $region8
    $region5: #{tpu_custom_call.1} parent=1 // loop_body
      %s29 = ssub.s32 %s24, 1
      %s30 = ssub.s32 %s24, 2
      %s31 = sadd.s32 %s24, 1
      %s32 = ssub.s32 %s24, %s31
      %p33 = scmp.eq.s32.totalorder %s32, 0
      %s35 = sadd.s32 %s34, 1
      %s36 = scalar_select %p33, %s34, %s35
      %p39 = pneg %p33
      %p40 = scmp.eq.s32.totalorder %s24, 1
      %p41 = por %p39, %p40
      %p42 = scmp.ne.s32.totalorder %s34, %s37
      %p43 = scmp.eq.s32.totalorder %s24, 0
      %p44 = por %p42, %p43
      %p45 = scmp.ne.s32.totalorder %s34, %s37
      %p46 = scmp.eq.s32.totalorder %s29, 1
      %p47 = por %p45, %p46
      %p48 = scmp.ne.s32.totalorder %s37, %s38
      %p49 = scmp.eq.s32.totalorder %s29, 0
      %p50 = por %p48, %p49
      %p51 = scmp.ne.s32.totalorder %s37, %s38
      %p52 = scmp.eq.s32.totalorder %s30, 1
      %p53 = por %p51, %p52
      %p55 = scmp.ne.s32.totalorder %s38, %s54
      %p56 = scmp.eq.s32.totalorder %s30, 0
      %p57 = por %p55, %p56
      %s59 = sadd.s32 %s58, 1
      %p62 = scmp.eq.s32.totalorder %s24, 1
      %p63 = scmp.ne.s32.totalorder %s58, %s60
      %p64 = scmp.eq.s32.totalorder %s24, 0
      %p65 = por %p63, %p64
      %p66 = scmp.ne.s32.totalorder %s58, %s60
      %p67 = scmp.eq.s32.totalorder %s29, 1
      %p68 = por %p66, %p67
      %p69 = scmp.ne.s32.totalorder %s60, %s61
      %p70 = scmp.eq.s32.totalorder %s29, 0
      %p71 = por %p69, %p70
      %p72 = scmp.ne.s32.totalorder %s60, %s61
      %p73 = scmp.eq.s32.totalorder %s30, 1
      %p74 = por %p72, %p73
      %p76 = scmp.ne.s32.totalorder %s61, %s75
      %p77 = scmp.eq.s32.totalorder %s30, 0
      %p78 = por %p76, %p77
      %s80 = sadd.s32 %s79, 1
      %p83 = scmp.eq.s32.totalorder %s24, 1
      %p84 = scmp.ne.s32.totalorder %s79, %s81
      %p85 = scmp.eq.s32.totalorder %s24, 0
      %p86 = por %p84, %p85
      %p87 = scmp.ne.s32.totalorder %s79, %s81
      %p88 = scmp.eq.s32.totalorder %s29, 1
      %p89 = por %p87, %p88
      %p90 = scmp.ne.s32.totalorder %s81, %s82
      %p91 = scmp.eq.s32.totalorder %s29, 0
      %p92 = por %p90, %p91
      %p93 = scmp.ne.s32.totalorder %s81, %s82
      %p94 = scmp.eq.s32.totalorder %s30, 1
      %p95 = por %p93, %p94
      %p97 = scmp.ne.s32.totalorder %s82, %s96
      %p98 = scmp.eq.s32.totalorder %s30, 0
      %p99 = por %p97, %p98
      %s101 = sadd.s32 %s100, 1
      %p104 = scmp.eq.s32.totalorder %s24, 1
      %p105 = scmp.ne.s32.totalorder %s100, %s102
      %p106 = scmp.eq.s32.totalorder %s24, 0
      %p107 = por %p105, %p106
      %p108 = scmp.ne.s32.totalorder %s100, %s102
      %p109 = scmp.eq.s32.totalorder %s29, 1
      %p110 = por %p108, %p109
      %p111 = scmp.ne.s32.totalorder %s102, %s103
      %p112 = scmp.eq.s32.totalorder %s29, 0
      %p113 = por %p111, %p112
      %p114 = scmp.ne.s32.totalorder %s102, %s103
      %p115 = scmp.eq.s32.totalorder %s30, 1
      %p116 = por %p114, %p115
      %p118 = scmp.ne.s32.totalorder %s103, %s117
      %p119 = scmp.eq.s32.totalorder %s30, 0
      %p120 = por %p118, %p119
      %s121 = ssub.s32 %s24, %s31
      %p122 = scmp.eq.s32.totalorder %s121, 0
      %s124 = sadd.s32 %s123, 1
      %s125 = scalar_select %p122, %s123, %s124
      %p128 = pneg %p122
      %p129 = scmp.eq.s32.totalorder %s24, 1
      %p130 = por %p128, %p129
      %p131 = scmp.ne.s32.totalorder %s123, %s126
      %p132 = scmp.eq.s32.totalorder %s24, 0
      %p133 = por %p131, %p132
      %p134 = scmp.ne.s32.totalorder %s123, %s126
      %p135 = scmp.eq.s32.totalorder %s29, 1
      %p136 = por %p134, %p135
      %p137 = scmp.ne.s32.totalorder %s126, %s127
      %p138 = scmp.eq.s32.totalorder %s29, 0
      %p139 = por %p137, %p138
      %p140 = scmp.ne.s32.totalorder %s126, %s127
      %p141 = scmp.eq.s32.totalorder %s30, 1
      %p142 = por %p140, %p141
      %p144 = scmp.ne.s32.totalorder %s127, %s143
      %p145 = scmp.eq.s32.totalorder %s30, 0
      %p146 = por %p144, %p145
      %s147 = ssub.s32 %s24, %s31
      %p148 = scmp.eq.s32.totalorder %s147, 0
      %s150 = sadd.s32 %s149, 1
      %s151 = scalar_select %p148, %s149, %s150
      %p154 = pneg %p148
      %p155 = scmp.eq.s32.totalorder %s24, 1
      %p156 = por %p154, %p155
      %p157 = scmp.ne.s32.totalorder %s149, %s152
      %p158 = scmp.eq.s32.totalorder %s24, 0
      %p159 = por %p157, %p158
      %p160 = scmp.ne.s32.totalorder %s149, %s152
      %p161 = scmp.eq.s32.totalorder %s29, 1
      %p162 = por %p160, %p161
      %p163 = scmp.ne.s32.totalorder %s152, %s153
      %p164 = scmp.eq.s32.totalorder %s29, 0
      %p165 = por %p163, %p164
      %p166 = scmp.ne.s32.totalorder %s152, %s153
      %p167 = scmp.eq.s32.totalorder %s30, 1
      %p168 = por %p166, %p167
      %p170 = scmp.ne.s32.totalorder %s153, %s169
      %p171 = scmp.eq.s32.totalorder %s30, 0
      %p172 = por %p170, %p171
      %s173 = ssub.s32 %s24, %s31
      %p174 = scmp.eq.s32.totalorder %s173, 0
      %s176 = sadd.s32 %s175, 1
      %s177 = scalar_select %p174, %s175, %s176
      %p180 = pneg %p174
      %p181 = scmp.eq.s32.totalorder %s24, 1
      %p182 = por %p180, %p181
      %p183 = scmp.ne.s32.totalorder %s175, %s178
      %p184 = scmp.eq.s32.totalorder %s24, 0
      %p185 = por %p183, %p184
      %p186 = scmp.ne.s32.totalorder %s175, %s178
      %p187 = scmp.eq.s32.totalorder %s29, 1
      %p188 = por %p186, %p187
      %p189 = scmp.ne.s32.totalorder %s178, %s179
      %p190 = scmp.eq.s32.totalorder %s29, 0
      %p191 = por %p189, %p190
      %p192 = scmp.ne.s32.totalorder %s178, %s179
      %p193 = scmp.eq.s32.totalorder %s30, 1
      %p194 = por %p192, %p193
      %p196 = scmp.ne.s32.totalorder %s179, %s195
      %p197 = scmp.eq.s32.totalorder %s30, 0
      %p198 = por %p196, %p197
      %s199 = ssub.s32 %s24, %s31
      %p200 = scmp.eq.s32.totalorder %s199, 0
      %s202 = sadd.s32 %s201, 1
      %s203 = scalar_select %p200, %s201, %s202
      %p206 = pneg %p200
      %p207 = scmp.eq.s32.totalorder %s24, 1
      %p208 = por %p206, %p207
      %p209 = scmp.ne.s32.totalorder %s201, %s204
      %p210 = scmp.eq.s32.totalorder %s24, 0
      %p211 = por %p209, %p210
      %p212 = scmp.ne.s32.totalorder %s201, %s204
      %p213 = scmp.eq.s32.totalorder %s29, 1
      %p214 = por %p212, %p213
      %p215 = scmp.ne.s32.totalorder %s204, %s205
      %p216 = scmp.eq.s32.totalorder %s29, 0
      %p217 = por %p215, %p216
      %p218 = scmp.ne.s32.totalorder %s204, %s205
      %p219 = scmp.eq.s32.totalorder %s30, 1
      %p220 = por %p218, %p219
      %p222 = scmp.ne.s32.totalorder %s205, %s221
      %p223 = scmp.eq.s32.totalorder %s30, 0
      %p224 = por %p222, %p223
      %p225 = scmp.le.s32.totalorder 1, %s24
      %p226 = scmp.lt.s32.totalorder %s24, 3
      %p227 = pnand %p225, %p226
      %p228 = pneg %p227
      // Predicated region
      $region9: #{tpu_custom_call.1} parent=5 // pred_check
        _
      $region10: #{tpu_custom_call.1} parent=5 // pred_check_branch
        %230 = sbr.rel (%p227) target = $region12
      $region11: #{tpu_custom_call.1} parent=5 // pred_region
        %s231 = ssub.s32 %s24, 1
        // Predicated region
        $region13: #{tpu_custom_call.1} parent=11 // pred_check
          %p232 = pneg %p71
        $region14: #{tpu_custom_call.1} parent=11 // pred_check_branch
          %234 = sbr.rel (%p232) target = $region16
        $region15: #{tpu_custom_call.1} parent=11 // pred_region
          %s236 = ssub.s32 2048, 2048
          %237 = vsyncadd [#allocation6], %s236
          %s238 = sshll.u32 [#allocation5], 4
          %s239 = int_to_ptr.vmem [resolvable:$true] %s238
          %244 = dma.hbm_to_vmem [thread:$0]  %s1, 2048, %s239, [#allocation6], 128, 128, 8
        $region16: #{tpu_custom_call.1} parent=11 // pred_fallthru
          _
        // Predicated region
        $region17: #{tpu_custom_call.1} parent=11 // pred_check
          %p245 = pneg %p92
        $region18: #{tpu_custom_call.1} parent=11 // pred_check_branch
          %247 = sbr.rel (%p245) target = $region20
        $region19: #{tpu_custom_call.1} parent=11 // pred_region
          %s249 = ssub.s32 4096, 4096
          %250 = vsyncadd [#allocation6], %s249
          %s251 = sshll.u32 [#allocation7], 4
          %s252 = int_to_ptr.vmem [resolvable:$true] %s251
          %257 = dma.hbm_to_vmem [thread:$0]  %s2, 4096, %s252, [#allocation6], 128, 128, 8
        $region20: #{tpu_custom_call.1} parent=11 // pred_fallthru
          _
        // Predicated region
        $region21: #{tpu_custom_call.1} parent=11 // pred_check
          %p258 = pneg %p113
        $region22: #{tpu_custom_call.1} parent=11 // pred_check_branch
          %260 = sbr.rel (%p258) target = $region24
        $region23: #{tpu_custom_call.1} parent=11 // pred_region
          _
        $region24: #{tpu_custom_call.1} parent=11 // pred_fallthru
          _
      $region12: #{tpu_custom_call.1} parent=5 // pred_fallthru
        _
      %p261 = scmp.lt.s32.totalorder %s24, 2
      // Predicated region
      $region25: #{tpu_custom_call.1} parent=5 // pred_check
        %p262 = pneg %p261
      $region26: #{tpu_custom_call.1} parent=5 // pred_check_branch
        %264 = sbr.rel (%p262) target = $region28
      $region27: #{tpu_custom_call.1} parent=5 // pred_region
        // Predicated region
        $region29: #{tpu_custom_call.1} parent=27 // pred_check
          %p265 = pneg %p44
        $region30: #{tpu_custom_call.1} parent=27 // pred_check_branch
          %267 = sbr.rel (%p265) target = $region32
        $region31: #{tpu_custom_call.1} parent=27 // pred_region
          %s268 = sand.u32 %s34, 1
          %s269 = scalar_lea.sflag [#allocation3], %s268
          %s270 = sand.u32 %s34, 1
          %s271 = smul.addr %s270, 256
          %s272 = scalar_lea.vmem [#allocation2], %s271
          %s273 = smul.u32 32, %s24
          %s275 = ssub.s32 4096, 4096
          %276 = vsyncadd %s269, %s275
          %s277 = smul.addr %s273, 128
          %s278 = scalar_lea.hbm %s0, %s277
          %s279 = sshll.u32 %s272, 4
          %s280 = int_to_ptr.vmem [resolvable:$true] %s279
          %285 = dma.hbm_to_vmem [thread:$0]  %s278, 4096, %s280, %s269, 128, 128, 8
        $region32: #{tpu_custom_call.1} parent=27 // pred_fallthru
          _
      $region28: #{tpu_custom_call.1} parent=5 // pred_fallthru
        _
      %p286 = scmp.le.s32.totalorder 1, %s24
      %p287 = scmp.lt.s32.totalorder %s24, 3
      %p288 = pnand %p286, %p287
      %p289 = pneg %p288
      // Predicated region
      $region33: #{tpu_custom_call.1} parent=5 // pred_check
        _
      $region34: #{tpu_custom_call.1} parent=5 // pred_check_branch
        %291 = sbr.rel (%p288) target = $region36
      $region35: #{tpu_custom_call.1} parent=5 // pred_region
        %s292 = ssub.s32 %s24, 1
        %s293 = sand.u32 %s37, 1
        %s294 = scalar_lea.sflag [#allocation3], %s293
        %s295 = sand.u32 %s37, 1
        %s296 = smul.addr %s295, 256
        %s297 = scalar_lea.vmem [#allocation2], %s296
        // Predicated region
        $region37: #{tpu_custom_call.1} parent=35 // pred_check
          %p298 = pneg %p50
        $region38: #{tpu_custom_call.1} parent=35 // pred_check_branch
          %300 = sbr.rel (%p298) target = $region40
        $region39: #{tpu_custom_call.1} parent=35 // pred_region
          %301 = dma.done %s294, 4096
        $region40: #{tpu_custom_call.1} parent=35 // pred_fallthru
          _
        // Predicated region
        $region41: #{tpu_custom_call.1} parent=35 // pred_check
          %p302 = pneg %p71
        $region42: #{tpu_custom_call.1} parent=35 // pred_check_branch
          %304 = sbr.rel (%p302) target = $region44
        $region43: #{tpu_custom_call.1} parent=35 // pred_region
          %305 = dma.done [#allocation6], 2048
        $region44: #{tpu_custom_call.1} parent=35 // pred_fallthru
          _
        // Predicated region
        $region45: #{tpu_custom_call.1} parent=35 // pred_check
          %p306 = pneg %p92
        $region46: #{tpu_custom_call.1} parent=35 // pred_check_branch
          %308 = sbr.rel (%p306) target = $region48
        $region47: #{tpu_custom_call.1} parent=35 // pred_region
          %309 = dma.done [#allocation6], 4096
        $region48: #{tpu_custom_call.1} parent=35 // pred_fallthru
          _
        %s310 = sand.u32 %s37, 1
        %s311 = scalar_lea.sflag [#allocation3], %s310
        %s312 = sand.u32 %s37, 1
        %s313 = smul.addr %s312, 256
        %s314 = scalar_lea.vmem [#allocation2], %s313
        %p315 = pneg %p50
        %p316 = pneg %p47
        %p317 = pneg %p71
        %p318 = pneg %p68
        %p319 = pneg %p92
        %p320 = pneg %p89
        %p321 = pneg %p113
        %p322 = pneg %p110
        %p323 = pneg %p139
        %p324 = pneg %p136
        %s325 = sand.u32 %s126, 1
        %s326 = scalar_lea.sflag [#allocation4], %s325
        %s327 = sand.u32 %s126, 1
        %s328 = smul.addr %s327, 256
        %s329 = scalar_lea.vmem [#allocation8], %s328
        %p330 = pneg %p165
        %p331 = pneg %p162
        %s332 = smul.u32 32, %s29
        %p333 = scmp.lt.s32.totalorder %s332, 63
        %s334 = scalar_select %p333, %s332, 63
        %s335 = smul.addr %s334, 8
        %s336 = scalar_lea.vmem %s5, %s335
        %p337 = pneg %p191
        %p338 = pneg %p188
        %s339 = sand.u32 %s29, 1
        %s340 = scalar_lea.sflag [#allocation10], %s339
        %s341 = sand.u32 %s178, 1
        %s342 = smul.addr %s341, 16
        %s343 = scalar_lea.vmem [#allocation9], %s342
        %p344 = pneg %p217
        %p345 = pneg %p214
        %s346 = sand.u32 %s29, 1
        %s347 = scalar_lea.sflag [#allocation10], %s346
        %s348 = sand.u32 %s204, 1
        %s349 = smul.addr %s348, 8
        %s350 = scalar_lea.vmem [#allocation11], %s349
        %s351 = smul.u32 32, %s29
        %s352 = smul.u32 32, %s29
        %s353 = smul.u32 32, %s29
        %p354 = scmp.lt.s32.totalorder %s353, 63
        %s355 = scalar_select %p354, %s353, 63
        %s356 = smul.addr %s355, 8
        %s357 = scalar_lea.vmem %s5, %s356
        %s358 = smul.u32 32, %s29
        %v360 = vld [vmem:[%s297] sm:$0xff]
        %v361 = vld [vmem:[%s297 + $0x8] sm:$0xff]
        %v362 = vld [vmem:[%s297 + $0x10] sm:$0xff]
        %v363 = vld [vmem:[%s297 + $0x18] sm:$0xff]
        %v364 = vld [vmem:[%s297 + $0x20] sm:$0xff]
        %v365 = vld [vmem:[%s297 + $0x28] sm:$0xff]
        %v366 = vld [vmem:[%s297 + $0x30] sm:$0xff]
        %v367 = vld [vmem:[%s297 + $0x38] sm:$0xff]
        %v368 = vld [vmem:[%s297 + $0x40] sm:$0xff]
        %v369 = vld [vmem:[%s297 + $0x48] sm:$0xff]
        %v370 = vld [vmem:[%s297 + $0x50] sm:$0xff]
        %v371 = vld [vmem:[%s297 + $0x58] sm:$0xff]
        %v372 = vld [vmem:[%s297 + $0x60] sm:$0xff]
        %v373 = vld [vmem:[%s297 + $0x68] sm:$0xff]
        %v374 = vld [vmem:[%s297 + $0x70] sm:$0xff]
        %v375 = vld [vmem:[%s297 + $0x78] sm:$0xff]
        %v376 = vld [vmem:[%s297 + $0x80] sm:$0xff]
        %v377 = vld [vmem:[%s297 + $0x88] sm:$0xff]
        %v378 = vld [vmem:[%s297 + $0x90] sm:$0xff]
        %v379 = vld [vmem:[%s297 + $0x98] sm:$0xff]
        %v380 = vld [vmem:[%s297 + $0xa0] sm:$0xff]
        %v381 = vld [vmem:[%s297 + $0xa8] sm:$0xff]
        %v382 = vld [vmem:[%s297 + $0xb0] sm:$0xff]
        %v383 = vld [vmem:[%s297 + $0xb8] sm:$0xff]
        %v384 = vld [vmem:[%s297 + $0xc0] sm:$0xff]
        %v385 = vld [vmem:[%s297 + $0xc8] sm:$0xff]
        %v386 = vld [vmem:[%s297 + $0xd0] sm:$0xff]
        %v387 = vld [vmem:[%s297 + $0xd8] sm:$0xff]
        %v388 = vld [vmem:[%s297 + $0xe0] sm:$0xff]
        %v389 = vld [vmem:[%s297 + $0xe8] sm:$0xff]
        %v390 = vld [vmem:[%s297 + $0xf0] sm:$0xff]
        %v391 = vld [vmem:[%s297 + $0xf8] sm:$0xff]
        %v392 = vpack.c.bf16 %v361, %v360
        %v393 = vpack.c.bf16 %v363, %v362
        %v394 = vpack.c.bf16 %v365, %v364
        %v395 = vpack.c.bf16 %v367, %v366
        %v396 = vpack.c.bf16 %v369, %v368
        %v397 = vpack.c.bf16 %v371, %v370
        %v398 = vpack.c.bf16 %v373, %v372
        %v399 = vpack.c.bf16 %v375, %v374
        %v400 = vpack.c.bf16 %v377, %v376
        %v401 = vpack.c.bf16 %v379, %v378
        %v402 = vpack.c.bf16 %v381, %v380
        %v403 = vpack.c.bf16 %v383, %v382
        %v404 = vpack.c.bf16 %v385, %v384
        %v405 = vpack.c.bf16 %v387, %v386
        %v406 = vpack.c.bf16 %v389, %v388
        %v407 = vpack.c.bf16 %v391, %v390
        %v408 = vld [vmem:[#allocation5] sm:$0xff]
        %v409 = vld [vmem:[#allocation5 + $0x8] sm:$0xff]
        %v410 = vld [vmem:[#allocation5 + $0x10] sm:$0xff]
        %v411 = vld [vmem:[#allocation5 + $0x18] sm:$0xff]
        %v412 = vld [vmem:[#allocation5 + $0x20] sm:$0xff]
        %v413 = vld [vmem:[#allocation5 + $0x28] sm:$0xff]
        %v414 = vld [vmem:[#allocation5 + $0x30] sm:$0xff]
        %v415 = vld [vmem:[#allocation5 + $0x38] sm:$0xff]
        %v416 = vld [vmem:[#allocation5 + $0x40] sm:$0xff]
        %v417 = vld [vmem:[#allocation5 + $0x48] sm:$0xff]
        %v418 = vld [vmem:[#allocation5 + $0x50] sm:$0xff]
        %v419 = vld [vmem:[#allocation5 + $0x58] sm:$0xff]
        %v420 = vld [vmem:[#allocation5 + $0x60] sm:$0xff]
        %v421 = vld [vmem:[#allocation5 + $0x68] sm:$0xff]
        %v422 = vld [vmem:[#allocation5 + $0x70] sm:$0xff]
        %v423 = vld [vmem:[#allocation5 + $0x78] sm:$0xff]
        %v440 = vunpack.c.l.b16 %v408
        %v441 = vunpack.c.h.b16 %v408
        %v442 = vunpack.c.l.b16 %v409
        %v443 = vunpack.c.h.b16 %v409
        %v444 = vunpack.c.l.b16 %v410
        %v445 = vunpack.c.h.b16 %v410
        %v446 = vunpack.c.l.b16 %v411
        %v447 = vunpack.c.h.b16 %v411
        %v448 = vunpack.c.l.b16 %v412
        %v449 = vunpack.c.h.b16 %v412
        %v450 = vunpack.c.l.b16 %v413
        %v451 = vunpack.c.h.b16 %v413
        %v452 = vunpack.c.l.b16 %v414
        %v453 = vunpack.c.h.b16 %v414
        %v454 = vunpack.c.l.b16 %v415
        %v455 = vunpack.c.h.b16 %v415
        %v456 = vunpack.c.l.b16 %v416
        %v457 = vunpack.c.h.b16 %v416
        %v458 = vunpack.c.l.b16 %v417
        %v459 = vunpack.c.h.b16 %v417
        %v460 = vunpack.c.l.b16 %v418
        %v461 = vunpack.c.h.b16 %v418
        %v462 = vunpack.c.l.b16 %v419
        %v463 = vunpack.c.h.b16 %v419
        %v464 = vunpack.c.l.b16 %v420
        %v465 = vunpack.c.h.b16 %v420
        %v466 = vunpack.c.l.b16 %v421
        %v467 = vunpack.c.h.b16 %v421
        %v468 = vunpack.c.l.b16 %v422
        %v469 = vunpack.c.h.b16 %v422
        %v470 = vunpack.c.l.b16 %v423
        %v471 = vunpack.c.h.b16 %v423
        %v472 = vpack.c.b16 %v442, %v440
        %v473 = vpack.c.b16 %v443, %v441
        %v474 = vpack.c.b16 %v446, %v444
        %v475 = vpack.c.b16 %v447, %v445
        %v476 = vpack.c.b16 %v450, %v448
        %v477 = vpack.c.b16 %v451, %v449
        %v478 = vpack.c.b16 %v454, %v452
        %v479 = vpack.c.b16 %v455, %v453
        %v480 = vpack.c.b16 %v458, %v456
        %v481 = vpack.c.b16 %v459, %v457
        %v482 = vpack.c.b16 %v462, %v460
        %v483 = vpack.c.b16 %v463, %v461
        %v484 = vpack.c.b16 %v466, %v464
        %v485 = vpack.c.b16 %v467, %v465
        %v486 = vpack.c.b16 %v470, %v468
        %v487 = vpack.c.b16 %v471, %v469
        %504 = vmatprep.subr.bf16.mxu0 %v473
        %505 = vmatpush1.bf16.msra.mxu0 %v472
        %506 = vmatprep.subr.bf16.mxu0 %v475
        %507 = vmatpush1.bf16.msra.mxu0 %v474
        %508 = vmatprep.subr.bf16.mxu0 %v477
        %509 = vmatpush1.bf16.msra.mxu0 %v476
        %510 = vmatprep.subr.bf16.mxu0 %v479
        %511 = vmatpush1.bf16.msra.mxu0 %v478
        %512 = vmatprep.subr.bf16.mxu0 %v481
        %513 = vmatpush1.bf16.msra.mxu0 %v480
        %514 = vmatprep.subr.bf16.mxu0 %v483
        %515 = vmatpush1.bf16.msra.mxu0 %v482
        %516 = vmatprep.subr.bf16.mxu0 %v485
        %517 = vmatpush1.bf16.msra.mxu0 %v484
        %518 = vmatprep.subr.bf16.mxu0 %v487
        %519 = vmatpush1.bf16.msra.mxu0 %v486
        %520 = vmatprep.subr.bf16.mxu0 0
        %521 = vmatpush1.bf16.msra.mxu0 0
        %522 = vmatprep.subr.bf16.mxu0 0
        %523 = vmatpush1.bf16.msra.mxu0 0
        %524 = vmatprep.subr.bf16.mxu0 0
        %525 = vmatpush1.bf16.msra.mxu0 0
        %526 = vmatprep.subr.bf16.mxu0 0
        %527 = vmatpush1.bf16.msra.mxu0 0
        %528 = vmatprep.subr.bf16.mxu0 0
        %529 = vmatpush1.bf16.msra.mxu0 0
        %530 = vmatprep.subr.bf16.mxu0 0
        %531 = vmatpush1.bf16.msra.mxu0 0
        %532 = vmatprep.subr.bf16.mxu0 0
        %533 = vmatpush1.bf16.msra.mxu0 0
        %534 = vmatprep.subr.bf16.mxu0 0
        %535 = vmatpush1.bf16.msra.mxu0 0
        %536 = vmatprep.mubr.bf16.mxu0 0
        %537 = vmatmul.mubr.bf16.gmra.mrb[0].mxu0 %v392
        %v538 = vpop.f32.mrb[0].mxu0
        %v539 = vadd.f32 0.0, %v538
        %v540 = vpop.f32.mrb[0].mxu0
        %v541 = vadd.f32 0.0, %v540
        %v542 = vpop.f32.mrb[0].mxu0
        %v543 = vadd.f32 0.0, %v542
        %v544 = vpop.f32.mrb[0].mxu0
        %v545 = vadd.f32 0.0, %v544
        %546 = vmatprep.mubr.bf16.mxu0 0
        %547 = vmatmul.mubr.bf16.gmra.mrb[0].mxu0 %v393
        %v548 = vpop.f32.mrb[0].mxu0
        %v549 = vadd.f32 0.0, %v548
        %v550 = vpop.f32.mrb[0].mxu0
        %v551 = vadd.f32 0.0, %v550
        %v552 = vpop.f32.mrb[0].mxu0
        %v553 = vadd.f32 0.0, %v552
        %v554 = vpop.f32.mrb[0].mxu0
        %v555 = vadd.f32 0.0, %v554
        %556 = vmatprep.mubr.bf16.mxu0 0
        %557 = vmatmul.mubr.bf16.gmra.mrb[0].mxu0 %v394
        %v558 = vpop.f32.mrb[0].mxu0
        %v559 = vadd.f32 0.0, %v558
        %v560 = vpop.f32.mrb[0].mxu0
        %v561 = vadd.f32 0.0, %v560
        %v562 = vpop.f32.mrb[0].mxu0
        %v563 = vadd.f32 0.0, %v562
        %v564 = vpop.f32.mrb[0].mxu0
        %v565 = vadd.f32 0.0, %v564
        %566 = vmatprep.mubr.bf16.mxu0 0
        %567 = vmatmul.mubr.bf16.gmra.mrb[0].mxu0 %v395
        %v568 = vpop.f32.mrb[0].mxu0
        %v569 = vadd.f32 0.0, %v568
        %v570 = vpop.f32.mrb[0].mxu0
        %v571 = vadd.f32 0.0, %v570
        %v572 = vpop.f32.mrb[0].mxu0
        %v573 = vadd.f32 0.0, %v572
        %v574 = vpop.f32.mrb[0].mxu0
        %v575 = vadd.f32 0.0, %v574
        %576 = vmatprep.mubr.bf16.mxu0 0
        %577 = vmatmul.mubr.bf16.gmra.mrb[0].mxu0 %v396
        %v578 = vpop.f32.mrb[0].mxu0
        %v579 = vadd.f32 0.0, %v578
        %v580 = vpop.f32.mrb[0].mxu0
        %v581 = vadd.f32 0.0, %v580
        %v582 = vpop.f32.mrb[0].mxu0
        %v583 = vadd.f32 0.0, %v582
        %v584 = vpop.f32.mrb[0].mxu0
        %v585 = vadd.f32 0.0, %v584
        %586 = vmatprep.mubr.bf16.mxu0 0
        %587 = vmatmul.mubr.bf16.gmra.mrb[0].mxu0 %v397
        %v588 = vpop.f32.mrb[0].mxu0
        %v589 = vadd.f32 0.0, %v588
        %v590 = vpop.f32.mrb[0].mxu0
        %v591 = vadd.f32 0.0, %v590
        %v592 = vpop.f32.mrb[0].mxu0
        %v593 = vadd.f32 0.0, %v592
        %v594 = vpop.f32.mrb[0].mxu0
        %v595 = vadd.f32 0.0, %v594
        %596 = vmatprep.mubr.bf16.mxu0 0
        %597 = vmatmul.mubr.bf16.gmra.mrb[0].mxu0 %v398
        %v598 = vpop.f32.mrb[0].mxu0
        %v599 = vadd.f32 0.0, %v598
        %v600 = vpop.f32.mrb[0].mxu0
        %v601 = vadd.f32 0.0, %v600
        %v602 = vpop.f32.mrb[0].mxu0
        %v603 = vadd.f32 0.0, %v602
        %v604 = vpop.f32.mrb[0].mxu0
        %v605 = vadd.f32 0.0, %v604
        %606 = vmatprep.mubr.bf16.mxu0 0
        %607 = vmatmul.mubr.bf16.gmra.mrb[0].mxu0 %v399
        %v608 = vpop.f32.mrb[0].mxu0
        %v609 = vadd.f32 0.0, %v608
        %v610 = vpop.f32.mrb[0].mxu0
        %v611 = vadd.f32 0.0, %v610
        %v612 = vpop.f32.mrb[0].mxu0
        %v613 = vadd.f32 0.0, %v612
        %v614 = vpop.f32.mrb[0].mxu0
        %v615 = vadd.f32 0.0, %v614
        %616 = vmatprep.mubr.bf16.mxu0 0
        %617 = vmatmul.mubr.bf16.gmra.mrb[0].mxu0 %v400
        %v618 = vpop.f32.mrb[0].mxu0
        %v619 = vadd.f32 0.0, %v618
        %v620 = vpop.f32.mrb[0].mxu0
        %v621 = vadd.f32 0.0, %v620
        %v622 = vpop.f32.mrb[0].mxu0
        %v623 = vadd.f32 0.0, %v622
        %v624 = vpop.f32.mrb[0].mxu0
        %v625 = vadd.f32 0.0, %v624
        %626 = vmatprep.mubr.bf16.mxu0 0
        %627 = vmatmul.mubr.bf16.gmra.mrb[0].mxu0 %v401
        %v628 = vpop.f32.mrb[0].mxu0
        %v629 = vadd.f32 0.0, %v628
        %v630 = vpop.f32.mrb[0].mxu0
        %v631 = vadd.f32 0.0, %v630
        %v632 = vpop.f32.mrb[0].mxu0
        %v633 = vadd.f32 0.0, %v632
        %v634 = vpop.f32.mrb[0].mxu0
        %v635 = vadd.f32 0.0, %v634
        %636 = vmatprep.mubr.bf16.mxu0 0
        %637 = vmatmul.mubr.bf16.gmra.mrb[0].mxu0 %v402
        %v638 = vpop.f32.mrb[0].mxu0
        %v639 = vadd.f32 0.0, %v638
        %v640 = vpop.f32.mrb[0].mxu0
        %v641 = vadd.f32 0.0, %v640
        %v642 = vpop.f32.mrb[0].mxu0
        %v643 = vadd.f32 0.0, %v642
        %v644 = vpop.f32.mrb[0].mxu0
        %v645 = vadd.f32 0.0, %v644
        %646 = vmatprep.mubr.bf16.mxu0 0
        %647 = vmatmul.mubr.bf16.gmra.mrb[0].mxu0 %v403
        %v648 = vpop.f32.mrb[0].mxu0
        %v649 = vadd.f32 0.0, %v648
        %v650 = vpop.f32.mrb[0].mxu0
        %v651 = vadd.f32 0.0, %v650
        %v652 = vpop.f32.mrb[0].mxu0
        %v653 = vadd.f32 0.0, %v652
        %v654 = vpop.f32.mrb[0].mxu0
        %v655 = vadd.f32 0.0, %v654
        %656 = vmatprep.mubr.bf16.mxu0 0
        %657 = vmatmul.mubr.bf16.gmra.mrb[0].mxu0 %v404
        %v658 = vpop.f32.mrb[0].mxu0
        %v659 = vadd.f32 0.0, %v658
        %v660 = vpop.f32.mrb[0].mxu0
        %v661 = vadd.f32 0.0, %v660
        %v662 = vpop.f32.mrb[0].mxu0
        %v663 = vadd.f32 0.0, %v662
        %v664 = vpop.f32.mrb[0].mxu0
        %v665 = vadd.f32 0.0, %v664
        %666 = vmatprep.mubr.bf16.mxu0 0
        %667 = vmatmul.mubr.bf16.gmra.mrb[0].mxu0 %v405
        %v668 = vpop.f32.mrb[0].mxu0
        %v669 = vadd.f32 0.0, %v668
        %v670 = vpop.f32.mrb[0].mxu0
        %v671 = vadd.f32 0.0, %v670
        %v672 = vpop.f32.mrb[0].mxu0
        %v673 = vadd.f32 0.0, %v672
        %v674 = vpop.f32.mrb[0].mxu0
        %v675 = vadd.f32 0.0, %v674
        %676 = vmatprep.mubr.bf16.mxu0 0
        %677 = vmatmul.mubr.bf16.gmra.mrb[0].mxu0 %v406
        %v678 = vpop.f32.mrb[0].mxu0
        %v679 = vadd.f32 0.0, %v678
        %v680 = vpop.f32.mrb[0].mxu0
        %v681 = vadd.f32 0.0, %v680
        %v682 = vpop.f32.mrb[0].mxu0
        %v683 = vadd.f32 0.0, %v682
        %v684 = vpop.f32.mrb[0].mxu0
        %v685 = vadd.f32 0.0, %v684
        %686 = vmatprep.mubr.bf16.mxu0 0
        %687 = vmatmul.mubr.bf16.gmra.mrb[0].mxu0 %v407
        %v688 = vpop.f32.mrb[0].mxu0
        %v689 = vadd.f32 0.0, %v688
        %v690 = vpop.f32.mrb[0].mxu0
        %v691 = vadd.f32 0.0, %v690
        %v692 = vpop.f32.mrb[0].mxu0
        %v693 = vadd.f32 0.0, %v692
        %v694 = vpop.f32.mrb[0].mxu0
        %v695 = vadd.f32 0.0, %v694
        %696 = vdwg.mxu0
        %v697 = vld [vmem:[%s3] sm:$0x3]
        %v698 = vmul.f32 %v539, 2.0
        %v699 = vmul.f32 %v541, 2.0
        %v700 = vmul.f32 %v543, 2.0
        %v701 = vmul.f32 %v545, 2.0
        %v702 = vmul.f32 %v549, 2.0
        %v703 = vmul.f32 %v551, 2.0
        %v704 = vmul.f32 %v553, 2.0
        %v705 = vmul.f32 %v555, 2.0
        %v706 = vmul.f32 %v559, 2.0
        %v707 = vmul.f32 %v561, 2.0
        %v708 = vmul.f32 %v563, 2.0
        %v709 = vmul.f32 %v565, 2.0
        %v710 = vmul.f32 %v569, 2.0
        %v711 = vmul.f32 %v571, 2.0
        %v712 = vmul.f32 %v573, 2.0
        %v713 = vmul.f32 %v575, 2.0
        %v714 = vmul.f32 %v579, 2.0
        %v715 = vmul.f32 %v581, 2.0
        %v716 = vmul.f32 %v583, 2.0
        %v717 = vmul.f32 %v585, 2.0
        %v718 = vmul.f32 %v589, 2.0
        %v719 = vmul.f32 %v591, 2.0
        %v720 = vmul.f32 %v593, 2.0
        %v721 = vmul.f32 %v595, 2.0
        %v722 = vmul.f32 %v599, 2.0
        %v723 = vmul.f32 %v601, 2.0
        %v724 = vmul.f32 %v603, 2.0
        %v725 = vmul.f32 %v605, 2.0
        %v726 = vmul.f32 %v609, 2.0
        %v727 = vmul.f32 %v611, 2.0
        %v728 = vmul.f32 %v613, 2.0
        %v729 = vmul.f32 %v615, 2.0
        %v730 = vmul.f32 %v619, 2.0
        %v731 = vmul.f32 %v621, 2.0
        %v732 = vmul.f32 %v623, 2.0
        %v733 = vmul.f32 %v625, 2.0
        %v734 = vmul.f32 %v629, 2.0
        %v735 = vmul.f32 %v631, 2.0
        %v736 = vmul.f32 %v633, 2.0
        %v737 = vmul.f32 %v635, 2.0
        %v738 = vmul.f32 %v639, 2.0
        %v739 = vmul.f32 %v641, 2.0
        %v740 = vmul.f32 %v643, 2.0
        %v741 = vmul.f32 %v645, 2.0
        %v742 = vmul.f32 %v649, 2.0
        %v743 = vmul.f32 %v651, 2.0
        %v744 = vmul.f32 %v653, 2.0
        %v745 = vmul.f32 %v655, 2.0
        %v746 = vmul.f32 %v659, 2.0
        %v747 = vmul.f32 %v661, 2.0
        %v748 = vmul.f32 %v663, 2.0
        %v749 = vmul.f32 %v665, 2.0
        %v750 = vmul.f32 %v669, 2.0
        %v751 = vmul.f32 %v671, 2.0
        %v752 = vmul.f32 %v673, 2.0
        %v753 = vmul.f32 %v675, 2.0
        %v754 = vmul.f32 %v679, 2.0
        %v755 = vmul.f32 %v681, 2.0
        %v756 = vmul.f32 %v683, 2.0
        %v757 = vmul.f32 %v685, 2.0
        %v758 = vmul.f32 %v689, 2.0
        %v759 = vmul.f32 %v691, 2.0
        %v760 = vmul.f32 %v693, 2.0
        %v761 = vmul.f32 %v695, 2.0
        %v763 = vlaneseq
        %v764 = vshrl.u32 %v763, 7
        %v765 = vsub.s32 0, %v764
        %v766 = vrot.slane %v697, %v765
        %v767 = vlaneseq
        %v768 = vshrl.u32 %v767, 7
        %v769 = vsub.s32 1, %v768
        %v770 = vrot.slane %v697, %v769
        %v773 = vsub.f32 %v766, %v698
        %v774 = vsub.f32 %v770, %v699
        %v775 = vsub.f32 %v766, %v700
        %v776 = vsub.f32 %v770, %v701
        %v777 = vsub.f32 %v766, %v702
        %v778 = vsub.f32 %v770, %v703
        %v779 = vsub.f32 %v766, %v704
        %v780 = vsub.f32 %v770, %v705
        %v781 = vsub.f32 %v766, %v706
        %v782 = vsub.f32 %v770, %v707
        %v783 = vsub.f32 %v766, %v708
        %v784 = vsub.f32 %v770, %v709
        %v785 = vsub.f32 %v766, %v710
        %v786 = vsub.f32 %v770, %v711
        %v787 = vsub.f32 %v766, %v712
        %v788 = vsub.f32 %v770, %v713
        %v789 = vsub.f32 %v766, %v714
        %v790 = vsub.f32 %v770, %v715
        %v791 = vsub.f32 %v766, %v716
        %v792 = vsub.f32 %v770, %v717
        %v793 = vsub.f32 %v766, %v718
        %v794 = vsub.f32 %v770, %v719
        %v795 = vsub.f32 %v766, %v720
        %v796 = vsub.f32 %v770, %v721
        %v797 = vsub.f32 %v766, %v722
        %v798 = vsub.f32 %v770, %v723
        %v799 = vsub.f32 %v766, %v724
        %v800 = vsub.f32 %v770, %v725
        %v801 = vsub.f32 %v766, %v726
        %v802 = vsub.f32 %v770, %v727
        %v803 = vsub.f32 %v766, %v728
        %v804 = vsub.f32 %v770, %v729
        %v805 = vsub.f32 %v766, %v730
        %v806 = vsub.f32 %v770, %v731
        %v807 = vsub.f32 %v766, %v732
        %v808 = vsub.f32 %v770, %v733
        %v809 = vsub.f32 %v766, %v734
        %v810 = vsub.f32 %v770, %v735
        %v811 = vsub.f32 %v766, %v736
        %v812 = vsub.f32 %v770, %v737
        %v813 = vsub.f32 %v766, %v738
        %v814 = vsub.f32 %v770, %v739
        %v815 = vsub.f32 %v766, %v740
        %v816 = vsub.f32 %v770, %v741
        %v817 = vsub.f32 %v766, %v742
        %v818 = vsub.f32 %v770, %v743
        %v819 = vsub.f32 %v766, %v744
        %v820 = vsub.f32 %v770, %v745
        %v821 = vsub.f32 %v766, %v746
        %v822 = vsub.f32 %v770, %v747
        %v823 = vsub.f32 %v766, %v748
        %v824 = vsub.f32 %v770, %v749
        %v825 = vsub.f32 %v766, %v750
        %v826 = vsub.f32 %v770, %v751
        %v827 = vsub.f32 %v766, %v752
        %v828 = vsub.f32 %v770, %v753
        %v829 = vsub.f32 %v766, %v754
        %v830 = vsub.f32 %v770, %v755
        %v831 = vsub.f32 %v766, %v756
        %v832 = vsub.f32 %v770, %v757
        %v833 = vsub.f32 %v766, %v758
        %v834 = vsub.f32 %v770, %v759
        %v835 = vsub.f32 %v766, %v760
        %v836 = vsub.f32 %v770, %v761
        %v837 = vmin.f32 %v773, %v774
        %838 = vmin.xlane.f32.xlu0 %v837
        %v839 = vpop.xlane.xlu0 %838
        %v840 = vmin.f32 %v775, %v776
        %841 = vmin.xlane.f32.xlu0 %v840
        %v842 = vpop.xlane.xlu0 %841
        %v843 = vmin.f32 %v777, %v778
        %844 = vmin.xlane.f32.xlu0 %v843
        %v845 = vpop.xlane.xlu0 %844
        %v846 = vmin.f32 %v779, %v780
        %847 = vmin.xlane.f32.xlu0 %v846
        %v848 = vpop.xlane.xlu0 %847
        %v849 = vmin.f32 %v781, %v782
        %850 = vmin.xlane.f32.xlu0 %v849
        %v851 = vpop.xlane.xlu0 %850
        %v852 = vmin.f32 %v783, %v784
        %853 = vmin.xlane.f32.xlu0 %v852
        %v854 = vpop.xlane.xlu0 %853
        %v855 = vmin.f32 %v785, %v786
        %856 = vmin.xlane.f32.xlu0 %v855
        %v857 = vpop.xlane.xlu0 %856
        %v858 = vmin.f32 %v787, %v788
        %859 = vmin.xlane.f32.xlu0 %v858
        %v860 = vpop.xlane.xlu0 %859
        %v861 = vmin.f32 %v789, %v790
        %862 = vmin.xlane.f32.xlu0 %v861
        %v863 = vpop.xlane.xlu0 %862
        %v864 = vmin.f32 %v791, %v792
        %865 = vmin.xlane.f32.xlu0 %v864
        %v866 = vpop.xlane.xlu0 %865
        %v867 = vmin.f32 %v793, %v794
        %868 = vmin.xlane.f32.xlu0 %v867
        %v869 = vpop.xlane.xlu0 %868
        %v870 = vmin.f32 %v795, %v796
        %871 = vmin.xlane.f32.xlu0 %v870
        %v872 = vpop.xlane.xlu0 %871
        %v873 = vmin.f32 %v797, %v798
        %874 = vmin.xlane.f32.xlu0 %v873
        %v875 = vpop.xlane.xlu0 %874
        %v876 = vmin.f32 %v799, %v800
        %877 = vmin.xlane.f32.xlu0 %v876
        %v878 = vpop.xlane.xlu0 %877
        %v879 = vmin.f32 %v801, %v802
        %880 = vmin.xlane.f32.xlu0 %v879
        %v881 = vpop.xlane.xlu0 %880
        %v882 = vmin.f32 %v803, %v804
        %883 = vmin.xlane.f32.xlu0 %v882
        %v884 = vpop.xlane.xlu0 %883
        %v885 = vmin.f32 %v805, %v806
        %886 = vmin.xlane.f32.xlu0 %v885
        %v887 = vpop.xlane.xlu0 %886
        %v888 = vmin.f32 %v807, %v808
        %889 = vmin.xlane.f32.xlu0 %v888
        %v890 = vpop.xlane.xlu0 %889
        %v891 = vmin.f32 %v809, %v810
        %892 = vmin.xlane.f32.xlu0 %v891
        %v893 = vpop.xlane.xlu0 %892
        %v894 = vmin.f32 %v811, %v812
        %895 = vmin.xlane.f32.xlu0 %v894
        %v896 = vpop.xlane.xlu0 %895
        %v897 = vmin.f32 %v813, %v814
        %898 = vmin.xlane.f32.xlu0 %v897
        %v899 = vpop.xlane.xlu0 %898
        %v900 = vmin.f32 %v815, %v816
        %901 = vmin.xlane.f32.xlu0 %v900
        %v902 = vpop.xlane.xlu0 %901
        %v903 = vmin.f32 %v817, %v818
        %904 = vmin.xlane.f32.xlu0 %v903
        %v905 = vpop.xlane.xlu0 %904
        %v906 = vmin.f32 %v819, %v820
        %907 = vmin.xlane.f32.xlu0 %v906
        %v908 = vpop.xlane.xlu0 %907
        %v909 = vmin.f32 %v821, %v822
        %910 = vmin.xlane.f32.xlu0 %v909
        %v911 = vpop.xlane.xlu0 %910
        %v912 = vmin.f32 %v823, %v824
        %913 = vmin.xlane.f32.xlu0 %v912
        %v914 = vpop.xlane.xlu0 %913
        %v915 = vmin.f32 %v825, %v826
        %916 = vmin.xlane.f32.xlu0 %v915
        %v917 = vpop.xlane.xlu0 %916
        %v918 = vmin.f32 %v827, %v828
        %919 = vmin.xlane.f32.xlu0 %v918
        %v920 = vpop.xlane.xlu0 %919
        %v921 = vmin.f32 %v829, %v830
        %922 = vmin.xlane.f32.xlu0 %v921
        %v923 = vpop.xlane.xlu0 %922
        %v924 = vmin.f32 %v831, %v832
        %925 = vmin.xlane.f32.xlu0 %v924
        %v926 = vpop.xlane.xlu0 %925
        %v927 = vmin.f32 %v833, %v834
        %928 = vmin.xlane.f32.xlu0 %v927
        %v929 = vpop.xlane.xlu0 %928
        %v930 = vmin.f32 %v835, %v836
        %931 = vmin.xlane.f32.xlu0 %v930
        %v932 = vpop.xlane.xlu0 %931
        %v933 = vlaneseq
        %v934 = vand.u32 %v933, 127
        %v935 = vadd.s32 %v934, 128
        %vm936 = vcmp.eq.f32.partialorder %v773, %v839
        %vm937 = vcmp.eq.f32.partialorder %v774, %v839
        %vm938 = vcmp.eq.f32.partialorder %v775, %v842
        %vm939 = vcmp.eq.f32.partialorder %v776, %v842
        %vm940 = vcmp.eq.f32.partialorder %v777, %v845
        %vm941 = vcmp.eq.f32.partialorder %v778, %v845
        %vm942 = vcmp.eq.f32.partialorder %v779, %v848
        %vm943 = vcmp.eq.f32.partialorder %v780, %v848
        %vm944 = vcmp.eq.f32.partialorder %v781, %v851
        %vm945 = vcmp.eq.f32.partialorder %v782, %v851
        %vm946 = vcmp.eq.f32.partialorder %v783, %v854
        %vm947 = vcmp.eq.f32.partialorder %v784, %v854
        %vm948 = vcmp.eq.f32.partialorder %v785, %v857
        %vm949 = vcmp.eq.f32.partialorder %v786, %v857
        %vm950 = vcmp.eq.f32.partialorder %v787, %v860
        %vm951 = vcmp.eq.f32.partialorder %v788, %v860
        %vm952 = vcmp.eq.f32.partialorder %v789, %v863
        %vm953 = vcmp.eq.f32.partialorder %v790, %v863
        %vm954 = vcmp.eq.f32.partialorder %v791, %v866
        %vm955 = vcmp.eq.f32.partialorder %v792, %v866
        %vm956 = vcmp.eq.f32.partialorder %v793, %v869
        %vm957 = vcmp.eq.f32.partialorder %v794, %v869
        %vm958 = vcmp.eq.f32.partialorder %v795, %v872
        %vm959 = vcmp.eq.f32.partialorder %v796, %v872
        %vm960 = vcmp.eq.f32.partialorder %v797, %v875
        %vm961 = vcmp.eq.f32.partialorder %v798, %v875
        %vm962 = vcmp.eq.f32.partialorder %v799, %v878
        %vm963 = vcmp.eq.f32.partialorder %v800, %v878
        %vm964 = vcmp.eq.f32.partialorder %v801, %v881
        %vm965 = vcmp.eq.f32.partialorder %v802, %v881
        %vm966 = vcmp.eq.f32.partialorder %v803, %v884
        %vm967 = vcmp.eq.f32.partialorder %v804, %v884
        %vm968 = vcmp.eq.f32.partialorder %v805, %v887
        %vm969 = vcmp.eq.f32.partialorder %v806, %v887
        %vm970 = vcmp.eq.f32.partialorder %v807, %v890
        %vm971 = vcmp.eq.f32.partialorder %v808, %v890
        %vm972 = vcmp.eq.f32.partialorder %v809, %v893
        %vm973 = vcmp.eq.f32.partialorder %v810, %v893
        %vm974 = vcmp.eq.f32.partialorder %v811, %v896
        %vm975 = vcmp.eq.f32.partialorder %v812, %v896
        %vm976 = vcmp.eq.f32.partialorder %v813, %v899
        %vm977 = vcmp.eq.f32.partialorder %v814, %v899
        %vm978 = vcmp.eq.f32.partialorder %v815, %v902
        %vm979 = vcmp.eq.f32.partialorder %v816, %v902
        %vm980 = vcmp.eq.f32.partialorder %v817, %v905
        %vm981 = vcmp.eq.f32.partialorder %v818, %v905
        %vm982 = vcmp.eq.f32.partialorder %v819, %v908
        %vm983 = vcmp.eq.f32.partialorder %v820, %v908
        %vm984 = vcmp.eq.f32.partialorder %v821, %v911
        %vm985 = vcmp.eq.f32.partialorder %v822, %v911
        %vm986 = vcmp.eq.f32.partialorder %v823, %v914
        %vm987 = vcmp.eq.f32.partialorder %v824, %v914
        %vm988 = vcmp.eq.f32.partialorder %v825, %v917
        %vm989 = vcmp.eq.f32.partialorder %v826, %v917
        %vm990 = vcmp.eq.f32.partialorder %v827, %v920
        %vm991 = vcmp.eq.f32.partialorder %v828, %v920
        %vm992 = vcmp.eq.f32.partialorder %v829, %v923
        %vm993 = vcmp.eq.f32.partialorder %v830, %v923
        %vm994 = vcmp.eq.f32.partialorder %v831, %v926
        %vm995 = vcmp.eq.f32.partialorder %v832, %v926
        %vm996 = vcmp.eq.f32.partialorder %v833, %v929
        %vm997 = vcmp.eq.f32.partialorder %v834, %v929
        %vm998 = vcmp.eq.f32.partialorder %v835, %v932
        %vm999 = vcmp.eq.f32.partialorder %v836, %v932
        %v1000 = vsel %vm936, %v934, 256
        %v1001 = vsel %vm937, %v935, 256
        %v1002 = vsel %vm938, %v934, 256
        %v1003 = vsel %vm939, %v935, 256
        %v1004 = vsel %vm940, %v934, 256
        %v1005 = vsel %vm941, %v935, 256
        %v1006 = vsel %vm942, %v934, 256
        %v1007 = vsel %vm943, %v935, 256
        %v1008 = vsel %vm944, %v934, 256
        %v1009 = vsel %vm945, %v935, 256
        %v1010 = vsel %vm946, %v934, 256
        %v1011 = vsel %vm947, %v935, 256
        %v1012 = vsel %vm948, %v934, 256
        %v1013 = vsel %vm949, %v935, 256
        %v1014 = vsel %vm950, %v934, 256
        %v1015 = vsel %vm951, %v935, 256
        %v1016 = vsel %vm952, %v934, 256
        %v1017 = vsel %vm953, %v935, 256
        %v1018 = vsel %vm954, %v934, 256
        %v1019 = vsel %vm955, %v935, 256
        %v1020 = vsel %vm956, %v934, 256
        %v1021 = vsel %vm957, %v935, 256
        %v1022 = vsel %vm958, %v934, 256
        %v1023 = vsel %vm959, %v935, 256
        %v1024 = vsel %vm960, %v934, 256
        %v1025 = vsel %vm961, %v935, 256
        %v1026 = vsel %vm962, %v934, 256
        %v1027 = vsel %vm963, %v935, 256
        %v1028 = vsel %vm964, %v934, 256
        %v1029 = vsel %vm965, %v935, 256
        %v1030 = vsel %vm966, %v934, 256
        %v1031 = vsel %vm967, %v935, 256
        %v1032 = vsel %vm968, %v934, 256
        %v1033 = vsel %vm969, %v935, 256
        %v1034 = vsel %vm970, %v934, 256
        %v1035 = vsel %vm971, %v935, 256
        %v1036 = vsel %vm972, %v934, 256
        %v1037 = vsel %vm973, %v935, 256
        %v1038 = vsel %vm974, %v934, 256
        %v1039 = vsel %vm975, %v935, 256
        %v1040 = vsel %vm976, %v934, 256
        %v1041 = vsel %vm977, %v935, 256
        %v1042 = vsel %vm978, %v934, 256
        %v1043 = vsel %vm979, %v935, 256
        %v1044 = vsel %vm980, %v934, 256
        %v1045 = vsel %vm981, %v935, 256
        %v1046 = vsel %vm982, %v934, 256
        %v1047 = vsel %vm983, %v935, 256
        %v1048 = vsel %vm984, %v934, 256
        %v1049 = vsel %vm985, %v935, 256
        %v1050 = vsel %vm986, %v934, 256
        %v1051 = vsel %vm987, %v935, 256
        %v1052 = vsel %vm988, %v934, 256
        %v1053 = vsel %vm989, %v935, 256
        %v1054 = vsel %vm990, %v934, 256
        %v1055 = vsel %vm991, %v935, 256
        %v1056 = vsel %vm992, %v934, 256
        %v1057 = vsel %vm993, %v935, 256
        %v1058 = vsel %vm994, %v934, 256
        %v1059 = vsel %vm995, %v935, 256
        %v1060 = vsel %vm996, %v934, 256
        %v1061 = vsel %vm997, %v935, 256
        %v1062 = vsel %vm998, %v934, 256
        %v1063 = vsel %vm999, %v935, 256
        %vm1064 = vcmp.lt.s32.totalorder %v1000, %v1001
        %v1065 = vsel %vm1064, %v1000, %v1001
        %v1066 = vand.u32 %v1065, 65535
        %v1067 = vshra.s32 %v1065, 16
        %v1068 = vcvt.s32.f32 %v1066
        %v1069 = vcvt.s32.f32 %v1067
        %1070 = vmin.xlane.f32.xlu0 %v1069
        %v1071 = vpop.xlane.xlu0 %1070
        %vm1072 = vcmp.eq.f32.partialorder %v1069, %v1071
        %v1073 = vsel %vm1072, %v1068, inf
        %1074 = vmin.xlane.f32.xlu0 %v1073
        %v1075 = vpop.xlane.xlu0 %1074
        %v1076 = vcvt.f32.s32 %v1075
        %v1077 = vcvt.f32.s32 %v1071
        %v1078 = vshll.u32 %v1077, 16
        %v1079 = vadd.s32 %v1078, %v1076
        %vm1080 = vcmp.lt.s32.totalorder %v1002, %v1003
        %v1081 = vsel %vm1080, %v1002, %v1003
        %v1082 = vand.u32 %v1081, 65535
        %v1083 = vshra.s32 %v1081, 16
        %v1084 = vcvt.s32.f32 %v1082
        %v1085 = vcvt.s32.f32 %v1083
        %1086 = vmin.xlane.f32.xlu0 %v1085
        %v1087 = vpop.xlane.xlu0 %1086
        %vm1088 = vcmp.eq.f32.partialorder %v1085, %v1087
        %v1089 = vsel %vm1088, %v1084, inf
        %1090 = vmin.xlane.f32.xlu0 %v1089
        %v1091 = vpop.xlane.xlu0 %1090
        %v1092 = vcvt.f32.s32 %v1091
        %v1093 = vcvt.f32.s32 %v1087
        %v1094 = vshll.u32 %v1093, 16
        %v1095 = vadd.s32 %v1094, %v1092
        %vm1096 = vcmp.lt.s32.totalorder %v1004, %v1005
        %v1097 = vsel %vm1096, %v1004, %v1005
        %v1098 = vand.u32 %v1097, 65535
        %v1099 = vshra.s32 %v1097, 16
        %v1100 = vcvt.s32.f32 %v1098
        %v1101 = vcvt.s32.f32 %v1099
        %1102 = vmin.xlane.f32.xlu0 %v1101
        %v1103 = vpop.xlane.xlu0 %1102
        %vm1104 = vcmp.eq.f32.partialorder %v1101, %v1103
        %v1105 = vsel %vm1104, %v1100, inf
        %1106 = vmin.xlane.f32.xlu0 %v1105
        %v1107 = vpop.xlane.xlu0 %1106
        %v1108 = vcvt.f32.s32 %v1107
        %v1109 = vcvt.f32.s32 %v1103
        %v1110 = vshll.u32 %v1109, 16
        %v1111 = vadd.s32 %v1110, %v1108
        %vm1112 = vcmp.lt.s32.totalorder %v1006, %v1007
        %v1113 = vsel %vm1112, %v1006, %v1007
        %v1114 = vand.u32 %v1113, 65535
        %v1115 = vshra.s32 %v1113, 16
        %v1116 = vcvt.s32.f32 %v1114
        %v1117 = vcvt.s32.f32 %v1115
        %1118 = vmin.xlane.f32.xlu0 %v1117
        %v1119 = vpop.xlane.xlu0 %1118
        %vm1120 = vcmp.eq.f32.partialorder %v1117, %v1119
        %v1121 = vsel %vm1120, %v1116, inf
        %1122 = vmin.xlane.f32.xlu0 %v1121
        %v1123 = vpop.xlane.xlu0 %1122
        %v1124 = vcvt.f32.s32 %v1123
        %v1125 = vcvt.f32.s32 %v1119
        %v1126 = vshll.u32 %v1125, 16
        %v1127 = vadd.s32 %v1126, %v1124
        %vm1128 = vcmp.lt.s32.totalorder %v1008, %v1009
        %v1129 = vsel %vm1128, %v1008, %v1009
        %v1130 = vand.u32 %v1129, 65535
        %v1131 = vshra.s32 %v1129, 16
        %v1132 = vcvt.s32.f32 %v1130
        %v1133 = vcvt.s32.f32 %v1131
        %1134 = vmin.xlane.f32.xlu0 %v1133
        %v1135 = vpop.xlane.xlu0 %1134
        %vm1136 = vcmp.eq.f32.partialorder %v1133, %v1135
        %v1137 = vsel %vm1136, %v1132, inf
        %1138 = vmin.xlane.f32.xlu0 %v1137
        %v1139 = vpop.xlane.xlu0 %1138
        %v1140 = vcvt.f32.s32 %v1139
        %v1141 = vcvt.f32.s32 %v1135
        %v1142 = vshll.u32 %v1141, 16
        %v1143 = vadd.s32 %v1142, %v1140
        %vm1144 = vcmp.lt.s32.totalorder %v1010, %v1011
        %v1145 = vsel %vm1144, %v1010, %v1011
        %v1146 = vand.u32 %v1145, 65535
        %v1147 = vshra.s32 %v1145, 16
        %v1148 = vcvt.s32.f32 %v1146
        %v1149 = vcvt.s32.f32 %v1147
        %1150 = vmin.xlane.f32.xlu0 %v1149
        %v1151 = vpop.xlane.xlu0 %1150
        %vm1152 = vcmp.eq.f32.partialorder %v1149, %v1151
        %v1153 = vsel %vm1152, %v1148, inf
        %1154 = vmin.xlane.f32.xlu0 %v1153
        %v1155 = vpop.xlane.xlu0 %1154
        %v1156 = vcvt.f32.s32 %v1155
        %v1157 = vcvt.f32.s32 %v1151
        %v1158 = vshll.u32 %v1157, 16
        %v1159 = vadd.s32 %v1158, %v1156
        %vm1160 = vcmp.lt.s32.totalorder %v1012, %v1013
        %v1161 = vsel %vm1160, %v1012, %v1013
        %v1162 = vand.u32 %v1161, 65535
        %v1163 = vshra.s32 %v1161, 16
        %v1164 = vcvt.s32.f32 %v1162
        %v1165 = vcvt.s32.f32 %v1163
        %1166 = vmin.xlane.f32.xlu0 %v1165
        %v1167 = vpop.xlane.xlu0 %1166
        %vm1168 = vcmp.eq.f32.partialorder %v1165, %v1167
        %v1169 = vsel %vm1168, %v1164, inf
        %1170 = vmin.xlane.f32.xlu0 %v1169
        %v1171 = vpop.xlane.xlu0 %1170
        %v1172 = vcvt.f32.s32 %v1171
        %v1173 = vcvt.f32.s32 %v1167
        %v1174 = vshll.u32 %v1173, 16
        %v1175 = vadd.s32 %v1174, %v1172
        %vm1176 = vcmp.lt.s32.totalorder %v1014, %v1015
        %v1177 = vsel %vm1176, %v1014, %v1015
        %v1178 = vand.u32 %v1177, 65535
        %v1179 = vshra.s32 %v1177, 16
        %v1180 = vcvt.s32.f32 %v1178
        %v1181 = vcvt.s32.f32 %v1179
        %1182 = vmin.xlane.f32.xlu0 %v1181
        %v1183 = vpop.xlane.xlu0 %1182
        %vm1184 = vcmp.eq.f32.partialorder %v1181, %v1183
        %v1185 = vsel %vm1184, %v1180, inf
        %1186 = vmin.xlane.f32.xlu0 %v1185
        %v1187 = vpop.xlane.xlu0 %1186
        %v1188 = vcvt.f32.s32 %v1187
        %v1189 = vcvt.f32.s32 %v1183
        %v1190 = vshll.u32 %v1189, 16
        %v1191 = vadd.s32 %v1190, %v1188
        %vm1192 = vcmp.lt.s32.totalorder %v1016, %v1017
        %v1193 = vsel %vm1192, %v1016, %v1017
        %v1194 = vand.u32 %v1193, 65535
        %v1195 = vshra.s32 %v1193, 16
        %v1196 = vcvt.s32.f32 %v1194
        %v1197 = vcvt.s32.f32 %v1195
        %1198 = vmin.xlane.f32.xlu0 %v1197
        %v1199 = vpop.xlane.xlu0 %1198
        %vm1200 = vcmp.eq.f32.partialorder %v1197, %v1199
        %v1201 = vsel %vm1200, %v1196, inf
        %1202 = vmin.xlane.f32.xlu0 %v1201
        %v1203 = vpop.xlane.xlu0 %1202
        %v1204 = vcvt.f32.s32 %v1203
        %v1205 = vcvt.f32.s32 %v1199
        %v1206 = vshll.u32 %v1205, 16
        %v1207 = vadd.s32 %v1206, %v1204
        %vm1208 = vcmp.lt.s32.totalorder %v1018, %v1019
        %v1209 = vsel %vm1208, %v1018, %v1019
        %v1210 = vand.u32 %v1209, 65535
        %v1211 = vshra.s32 %v1209, 16
        %v1212 = vcvt.s32.f32 %v1210
        %v1213 = vcvt.s32.f32 %v1211
        %1214 = vmin.xlane.f32.xlu0 %v1213
        %v1215 = vpop.xlane.xlu0 %1214
        %vm1216 = vcmp.eq.f32.partialorder %v1213, %v1215
        %v1217 = vsel %vm1216, %v1212, inf
        %1218 = vmin.xlane.f32.xlu0 %v1217
        %v1219 = vpop.xlane.xlu0 %1218
        %v1220 = vcvt.f32.s32 %v1219
        %v1221 = vcvt.f32.s32 %v1215
        %v1222 = vshll.u32 %v1221, 16
        %v1223 = vadd.s32 %v1222, %v1220
        %vm1224 = vcmp.lt.s32.totalorder %v1020, %v1021
        %v1225 = vsel %vm1224, %v1020, %v1021
        %v1226 = vand.u32 %v1225, 65535
        %v1227 = vshra.s32 %v1225, 16
        %v1228 = vcvt.s32.f32 %v1226
        %v1229 = vcvt.s32.f32 %v1227
        %1230 = vmin.xlane.f32.xlu0 %v1229
        %v1231 = vpop.xlane.xlu0 %1230
        %vm1232 = vcmp.eq.f32.partialorder %v1229, %v1231
        %v1233 = vsel %vm1232, %v1228, inf
        %1234 = vmin.xlane.f32.xlu0 %v1233
        %v1235 = vpop.xlane.xlu0 %1234
        %v1236 = vcvt.f32.s32 %v1235
        %v1237 = vcvt.f32.s32 %v1231
        %v1238 = vshll.u32 %v1237, 16
        %v1239 = vadd.s32 %v1238, %v1236
        %vm1240 = vcmp.lt.s32.totalorder %v1022, %v1023
        %v1241 = vsel %vm1240, %v1022, %v1023
        %v1242 = vand.u32 %v1241, 65535
        %v1243 = vshra.s32 %v1241, 16
        %v1244 = vcvt.s32.f32 %v1242
        %v1245 = vcvt.s32.f32 %v1243
        %1246 = vmin.xlane.f32.xlu0 %v1245
        %v1247 = vpop.xlane.xlu0 %1246
        %vm1248 = vcmp.eq.f32.partialorder %v1245, %v1247
        %v1249 = vsel %vm1248, %v1244, inf
        %1250 = vmin.xlane.f32.xlu0 %v1249
        %v1251 = vpop.xlane.xlu0 %1250
        %v1252 = vcvt.f32.s32 %v1251
        %v1253 = vcvt.f32.s32 %v1247
        %v1254 = vshll.u32 %v1253, 16
        %v1255 = vadd.s32 %v1254, %v1252
        %vm1256 = vcmp.lt.s32.totalorder %v1024, %v1025
        %v1257 = vsel %vm1256, %v1024, %v1025
        %v1258 = vand.u32 %v1257, 65535
        %v1259 = vshra.s32 %v1257, 16
        %v1260 = vcvt.s32.f32 %v1258
        %v1261 = vcvt.s32.f32 %v1259
        %1262 = vmin.xlane.f32.xlu0 %v1261
        %v1263 = vpop.xlane.xlu0 %1262
        %vm1264 = vcmp.eq.f32.partialorder %v1261, %v1263
        %v1265 = vsel %vm1264, %v1260, inf
        %1266 = vmin.xlane.f32.xlu0 %v1265
        %v1267 = vpop.xlane.xlu0 %1266
        %v1268 = vcvt.f32.s32 %v1267
        %v1269 = vcvt.f32.s32 %v1263
        %v1270 = vshll.u32 %v1269, 16
        %v1271 = vadd.s32 %v1270, %v1268
        %vm1272 = vcmp.lt.s32.totalorder %v1026, %v1027
        %v1273 = vsel %vm1272, %v1026, %v1027
        %v1274 = vand.u32 %v1273, 65535
        %v1275 = vshra.s32 %v1273, 16
        %v1276 = vcvt.s32.f32 %v1274
        %v1277 = vcvt.s32.f32 %v1275
        %1278 = vmin.xlane.f32.xlu0 %v1277
        %v1279 = vpop.xlane.xlu0 %1278
        %vm1280 = vcmp.eq.f32.partialorder %v1277, %v1279
        %v1281 = vsel %vm1280, %v1276, inf
        %1282 = vmin.xlane.f32.xlu0 %v1281
        %v1283 = vpop.xlane.xlu0 %1282
        %v1284 = vcvt.f32.s32 %v1283
        %v1285 = vcvt.f32.s32 %v1279
        %v1286 = vshll.u32 %v1285, 16
        %v1287 = vadd.s32 %v1286, %v1284
        %vm1288 = vcmp.lt.s32.totalorder %v1028, %v1029
        %v1289 = vsel %vm1288, %v1028, %v1029
        %v1290 = vand.u32 %v1289, 65535
        %v1291 = vshra.s32 %v1289, 16
        %v1292 = vcvt.s32.f32 %v1290
        %v1293 = vcvt.s32.f32 %v1291
        %1294 = vmin.xlane.f32.xlu0 %v1293
        %v1295 = vpop.xlane.xlu0 %1294
        %vm1296 = vcmp.eq.f32.partialorder %v1293, %v1295
        %v1297 = vsel %vm1296, %v1292, inf
        %1298 = vmin.xlane.f32.xlu0 %v1297
        %v1299 = vpop.xlane.xlu0 %1298
        %v1300 = vcvt.f32.s32 %v1299
        %v1301 = vcvt.f32.s32 %v1295
        %v1302 = vshll.u32 %v1301, 16
        %v1303 = vadd.s32 %v1302, %v1300
        %vm1304 = vcmp.lt.s32.totalorder %v1030, %v1031
        %v1305 = vsel %vm1304, %v1030, %v1031
        %v1306 = vand.u32 %v1305, 65535
        %v1307 = vshra.s32 %v1305, 16
        %v1308 = vcvt.s32.f32 %v1306
        %v1309 = vcvt.s32.f32 %v1307
        %1310 = vmin.xlane.f32.xlu0 %v1309
        %v1311 = vpop.xlane.xlu0 %1310
        %vm1312 = vcmp.eq.f32.partialorder %v1309, %v1311
        %v1313 = vsel %vm1312, %v1308, inf
        %1314 = vmin.xlane.f32.xlu0 %v1313
        %v1315 = vpop.xlane.xlu0 %1314
        %v1316 = vcvt.f32.s32 %v1315
        %v1317 = vcvt.f32.s32 %v1311
        %v1318 = vshll.u32 %v1317, 16
        %v1319 = vadd.s32 %v1318, %v1316
        %vm1320 = vcmp.lt.s32.totalorder %v1032, %v1033
        %v1321 = vsel %vm1320, %v1032, %v1033
        %v1322 = vand.u32 %v1321, 65535
        %v1323 = vshra.s32 %v1321, 16
        %v1324 = vcvt.s32.f32 %v1322
        %v1325 = vcvt.s32.f32 %v1323
        %1326 = vmin.xlane.f32.xlu0 %v1325
        %v1327 = vpop.xlane.xlu0 %1326
        %vm1328 = vcmp.eq.f32.partialorder %v1325, %v1327
        %v1329 = vsel %vm1328, %v1324, inf
        %1330 = vmin.xlane.f32.xlu0 %v1329
        %v1331 = vpop.xlane.xlu0 %1330
        %v1332 = vcvt.f32.s32 %v1331
        %v1333 = vcvt.f32.s32 %v1327
        %v1334 = vshll.u32 %v1333, 16
        %v1335 = vadd.s32 %v1334, %v1332
        %vm1336 = vcmp.lt.s32.totalorder %v1034, %v1035
        %v1337 = vsel %vm1336, %v1034, %v1035
        %v1338 = vand.u32 %v1337, 65535
        %v1339 = vshra.s32 %v1337, 16
        %v1340 = vcvt.s32.f32 %v1338
        %v1341 = vcvt.s32.f32 %v1339
        %1342 = vmin.xlane.f32.xlu0 %v1341
        %v1343 = vpop.xlane.xlu0 %1342
        %vm1344 = vcmp.eq.f32.partialorder %v1341, %v1343
        %v1345 = vsel %vm1344, %v1340, inf
        %1346 = vmin.xlane.f32.xlu0 %v1345
        %v1347 = vpop.xlane.xlu0 %1346
        %v1348 = vcvt.f32.s32 %v1347
        %v1349 = vcvt.f32.s32 %v1343
        %v1350 = vshll.u32 %v1349, 16
        %v1351 = vadd.s32 %v1350, %v1348
        %vm1352 = vcmp.lt.s32.totalorder %v1036, %v1037
        %v1353 = vsel %vm1352, %v1036, %v1037
        %v1354 = vand.u32 %v1353, 65535
        %v1355 = vshra.s32 %v1353, 16
        %v1356 = vcvt.s32.f32 %v1354
        %v1357 = vcvt.s32.f32 %v1355
        %1358 = vmin.xlane.f32.xlu0 %v1357
        %v1359 = vpop.xlane.xlu0 %1358
        %vm1360 = vcmp.eq.f32.partialorder %v1357, %v1359
        %v1361 = vsel %vm1360, %v1356, inf
        %1362 = vmin.xlane.f32.xlu0 %v1361
        %v1363 = vpop.xlane.xlu0 %1362
        %v1364 = vcvt.f32.s32 %v1363
        %v1365 = vcvt.f32.s32 %v1359
        %v1366 = vshll.u32 %v1365, 16
        %v1367 = vadd.s32 %v1366, %v1364
        %vm1368 = vcmp.lt.s32.totalorder %v1038, %v1039
        %v1369 = vsel %vm1368, %v1038, %v1039
        %v1370 = vand.u32 %v1369, 65535
        %v1371 = vshra.s32 %v1369, 16
        %v1372 = vcvt.s32.f32 %v1370
        %v1373 = vcvt.s32.f32 %v1371
        %1374 = vmin.xlane.f32.xlu0 %v1373
        %v1375 = vpop.xlane.xlu0 %1374
        %vm1376 = vcmp.eq.f32.partialorder %v1373, %v1375
        %v1377 = vsel %vm1376, %v1372, inf
        %1378 = vmin.xlane.f32.xlu0 %v1377
        %v1379 = vpop.xlane.xlu0 %1378
        %v1380 = vcvt.f32.s32 %v1379
        %v1381 = vcvt.f32.s32 %v1375
        %v1382 = vshll.u32 %v1381, 16
        %v1383 = vadd.s32 %v1382, %v1380
        %vm1384 = vcmp.lt.s32.totalorder %v1040, %v1041
        %v1385 = vsel %vm1384, %v1040, %v1041
        %v1386 = vand.u32 %v1385, 65535
        %v1387 = vshra.s32 %v1385, 16
        %v1388 = vcvt.s32.f32 %v1386
        %v1389 = vcvt.s32.f32 %v1387
        %1390 = vmin.xlane.f32.xlu0 %v1389
        %v1391 = vpop.xlane.xlu0 %1390
        %vm1392 = vcmp.eq.f32.partialorder %v1389, %v1391
        %v1393 = vsel %vm1392, %v1388, inf
        %1394 = vmin.xlane.f32.xlu0 %v1393
        %v1395 = vpop.xlane.xlu0 %1394
        %v1396 = vcvt.f32.s32 %v1395
        %v1397 = vcvt.f32.s32 %v1391
        %v1398 = vshll.u32 %v1397, 16
        %v1399 = vadd.s32 %v1398, %v1396
        %vm1400 = vcmp.lt.s32.totalorder %v1042, %v1043
        %v1401 = vsel %vm1400, %v1042, %v1043
        %v1402 = vand.u32 %v1401, 65535
        %v1403 = vshra.s32 %v1401, 16
        %v1404 = vcvt.s32.f32 %v1402
        %v1405 = vcvt.s32.f32 %v1403
        %1406 = vmin.xlane.f32.xlu0 %v1405
        %v1407 = vpop.xlane.xlu0 %1406
        %vm1408 = vcmp.eq.f32.partialorder %v1405, %v1407
        %v1409 = vsel %vm1408, %v1404, inf
        %1410 = vmin.xlane.f32.xlu0 %v1409
        %v1411 = vpop.xlane.xlu0 %1410
        %v1412 = vcvt.f32.s32 %v1411
        %v1413 = vcvt.f32.s32 %v1407
        %v1414 = vshll.u32 %v1413, 16
        %v1415 = vadd.s32 %v1414, %v1412
        %vm1416 = vcmp.lt.s32.totalorder %v1044, %v1045
        %v1417 = vsel %vm1416, %v1044, %v1045
        %v1418 = vand.u32 %v1417, 65535
        %v1419 = vshra.s32 %v1417, 16
        %v1420 = vcvt.s32.f32 %v1418
        %v1421 = vcvt.s32.f32 %v1419
        %1422 = vmin.xlane.f32.xlu0 %v1421
        %v1423 = vpop.xlane.xlu0 %1422
        %vm1424 = vcmp.eq.f32.partialorder %v1421, %v1423
        %v1425 = vsel %vm1424, %v1420, inf
        %1426 = vmin.xlane.f32.xlu0 %v1425
        %v1427 = vpop.xlane.xlu0 %1426
        %v1428 = vcvt.f32.s32 %v1427
        %v1429 = vcvt.f32.s32 %v1423
        %v1430 = vshll.u32 %v1429, 16
        %v1431 = vadd.s32 %v1430, %v1428
        %vm1432 = vcmp.lt.s32.totalorder %v1046, %v1047
        %v1433 = vsel %vm1432, %v1046, %v1047
        %v1434 = vand.u32 %v1433, 65535
        %v1435 = vshra.s32 %v1433, 16
        %v1436 = vcvt.s32.f32 %v1434
        %v1437 = vcvt.s32.f32 %v1435
        %1438 = vmin.xlane.f32.xlu0 %v1437
        %v1439 = vpop.xlane.xlu0 %1438
        %vm1440 = vcmp.eq.f32.partialorder %v1437, %v1439
        %v1441 = vsel %vm1440, %v1436, inf
        %1442 = vmin.xlane.f32.xlu0 %v1441
        %v1443 = vpop.xlane.xlu0 %1442
        %v1444 = vcvt.f32.s32 %v1443
        %v1445 = vcvt.f32.s32 %v1439
        %v1446 = vshll.u32 %v1445, 16
        %v1447 = vadd.s32 %v1446, %v1444
        %vm1448 = vcmp.lt.s32.totalorder %v1048, %v1049
        %v1449 = vsel %vm1448, %v1048, %v1049
        %v1450 = vand.u32 %v1449, 65535
        %v1451 = vshra.s32 %v1449, 16
        %v1452 = vcvt.s32.f32 %v1450
        %v1453 = vcvt.s32.f32 %v1451
        %1454 = vmin.xlane.f32.xlu0 %v1453
        %v1455 = vpop.xlane.xlu0 %1454
        %vm1456 = vcmp.eq.f32.partialorder %v1453, %v1455
        %v1457 = vsel %vm1456, %v1452, inf
        %1458 = vmin.xlane.f32.xlu0 %v1457
        %v1459 = vpop.xlane.xlu0 %1458
        %v1460 = vcvt.f32.s32 %v1459
        %v1461 = vcvt.f32.s32 %v1455
        %v1462 = vshll.u32 %v1461, 16
        %v1463 = vadd.s32 %v1462, %v1460
        %vm1464 = vcmp.lt.s32.totalorder %v1050, %v1051
        %v1465 = vsel %vm1464, %v1050, %v1051
        %v1466 = vand.u32 %v1465, 65535
        %v1467 = vshra.s32 %v1465, 16
        %v1468 = vcvt.s32.f32 %v1466
        %v1469 = vcvt.s32.f32 %v1467
        %1470 = vmin.xlane.f32.xlu0 %v1469
        %v1471 = vpop.xlane.xlu0 %1470
        %vm1472 = vcmp.eq.f32.partialorder %v1469, %v1471
        %v1473 = vsel %vm1472, %v1468, inf
        %1474 = vmin.xlane.f32.xlu0 %v1473
        %v1475 = vpop.xlane.xlu0 %1474
        %v1476 = vcvt.f32.s32 %v1475
        %v1477 = vcvt.f32.s32 %v1471
        %v1478 = vshll.u32 %v1477, 16
        %v1479 = vadd.s32 %v1478, %v1476
        %vm1480 = vcmp.lt.s32.totalorder %v1052, %v1053
        %v1481 = vsel %vm1480, %v1052, %v1053
        %v1482 = vand.u32 %v1481, 65535
        %v1483 = vshra.s32 %v1481, 16
        %v1484 = vcvt.s32.f32 %v1482
        %v1485 = vcvt.s32.f32 %v1483
        %1486 = vmin.xlane.f32.xlu0 %v1485
        %v1487 = vpop.xlane.xlu0 %1486
        %vm1488 = vcmp.eq.f32.partialorder %v1485, %v1487
        %v1489 = vsel %vm1488, %v1484, inf
        %1490 = vmin.xlane.f32.xlu0 %v1489
        %v1491 = vpop.xlane.xlu0 %1490
        %v1492 = vcvt.f32.s32 %v1491
        %v1493 = vcvt.f32.s32 %v1487
        %v1494 = vshll.u32 %v1493, 16
        %v1495 = vadd.s32 %v1494, %v1492
        %vm1496 = vcmp.lt.s32.totalorder %v1054, %v1055
        %v1497 = vsel %vm1496, %v1054, %v1055
        %v1498 = vand.u32 %v1497, 65535
        %v1499 = vshra.s32 %v1497, 16
        %v1500 = vcvt.s32.f32 %v1498
        %v1501 = vcvt.s32.f32 %v1499
        %1502 = vmin.xlane.f32.xlu0 %v1501
        %v1503 = vpop.xlane.xlu0 %1502
        %vm1504 = vcmp.eq.f32.partialorder %v1501, %v1503
        %v1505 = vsel %vm1504, %v1500, inf
        %1506 = vmin.xlane.f32.xlu0 %v1505
        %v1507 = vpop.xlane.xlu0 %1506
        %v1508 = vcvt.f32.s32 %v1507
        %v1509 = vcvt.f32.s32 %v1503
        %v1510 = vshll.u32 %v1509, 16
        %v1511 = vadd.s32 %v1510, %v1508
        %vm1512 = vcmp.lt.s32.totalorder %v1056, %v1057
        %v1513 = vsel %vm1512, %v1056, %v1057
        %v1514 = vand.u32 %v1513, 65535
        %v1515 = vshra.s32 %v1513, 16
        %v1516 = vcvt.s32.f32 %v1514
        %v1517 = vcvt.s32.f32 %v1515
        %1518 = vmin.xlane.f32.xlu0 %v1517
        %v1519 = vpop.xlane.xlu0 %1518
        %vm1520 = vcmp.eq.f32.partialorder %v1517, %v1519
        %v1521 = vsel %vm1520, %v1516, inf
        %1522 = vmin.xlane.f32.xlu0 %v1521
        %v1523 = vpop.xlane.xlu0 %1522
        %v1524 = vcvt.f32.s32 %v1523
        %v1525 = vcvt.f32.s32 %v1519
        %v1526 = vshll.u32 %v1525, 16
        %v1527 = vadd.s32 %v1526, %v1524
        %vm1528 = vcmp.lt.s32.totalorder %v1058, %v1059
        %v1529 = vsel %vm1528, %v1058, %v1059
        %v1530 = vand.u32 %v1529, 65535
        %v1531 = vshra.s32 %v1529, 16
        %v1532 = vcvt.s32.f32 %v1530
        %v1533 = vcvt.s32.f32 %v1531
        %1534 = vmin.xlane.f32.xlu0 %v1533
        %v1535 = vpop.xlane.xlu0 %1534
        %vm1536 = vcmp.eq.f32.partialorder %v1533, %v1535
        %v1537 = vsel %vm1536, %v1532, inf
        %1538 = vmin.xlane.f32.xlu0 %v1537
        %v1539 = vpop.xlane.xlu0 %1538
        %v1540 = vcvt.f32.s32 %v1539
        %v1541 = vcvt.f32.s32 %v1535
        %v1542 = vshll.u32 %v1541, 16
        %v1543 = vadd.s32 %v1542, %v1540
        %vm1544 = vcmp.lt.s32.totalorder %v1060, %v1061
        %v1545 = vsel %vm1544, %v1060, %v1061
        %v1546 = vand.u32 %v1545, 65535
        %v1547 = vshra.s32 %v1545, 16
        %v1548 = vcvt.s32.f32 %v1546
        %v1549 = vcvt.s32.f32 %v1547
        %1550 = vmin.xlane.f32.xlu0 %v1549
        %v1551 = vpop.xlane.xlu0 %1550
        %vm1552 = vcmp.eq.f32.partialorder %v1549, %v1551
        %v1553 = vsel %vm1552, %v1548, inf
        %1554 = vmin.xlane.f32.xlu0 %v1553
        %v1555 = vpop.xlane.xlu0 %1554
        %v1556 = vcvt.f32.s32 %v1555
        %v1557 = vcvt.f32.s32 %v1551
        %v1558 = vshll.u32 %v1557, 16
        %v1559 = vadd.s32 %v1558, %v1556
        %vm1560 = vcmp.lt.s32.totalorder %v1062, %v1063
        %v1561 = vsel %vm1560, %v1062, %v1063
        %v1562 = vand.u32 %v1561, 65535
        %v1563 = vshra.s32 %v1561, 16
        %v1564 = vcvt.s32.f32 %v1562
        %v1565 = vcvt.s32.f32 %v1563
        %1566 = vmin.xlane.f32.xlu0 %v1565
        %v1567 = vpop.xlane.xlu0 %1566
        %vm1568 = vcmp.eq.f32.partialorder %v1565, %v1567
        %v1569 = vsel %vm1568, %v1564, inf
        %1570 = vmin.xlane.f32.xlu0 %v1569
        %v1571 = vpop.xlane.xlu0 %1570
        %v1572 = vcvt.f32.s32 %v1571
        %v1573 = vcvt.f32.s32 %v1567
        %v1574 = vshll.u32 %v1573, 16
        %v1575 = vadd.s32 %v1574, %v1572
        %vm1576 = vcmask 7168
        %1577 = vst.msk [vmem:[%s357] sm:$0xff] %vm1576, %v1079
        %1578 = vst.msk [vmem:[%s357 + $0x8] sm:$0xff] %vm1576, %v1095
        %1579 = vst.msk [vmem:[%s357 + $0x10] sm:$0xff] %vm1576, %v1111
        %1580 = vst.msk [vmem:[%s357 + $0x18] sm:$0xff] %vm1576, %v1127
        %1581 = vst.msk [vmem:[%s357 + $0x20] sm:$0xff] %vm1576, %v1143
        %1582 = vst.msk [vmem:[%s357 + $0x28] sm:$0xff] %vm1576, %v1159
        %1583 = vst.msk [vmem:[%s357 + $0x30] sm:$0xff] %vm1576, %v1175
        %1584 = vst.msk [vmem:[%s357 + $0x38] sm:$0xff] %vm1576, %v1191
        %1585 = vst.msk [vmem:[%s357 + $0x40] sm:$0xff] %vm1576, %v1207
        %1586 = vst.msk [vmem:[%s357 + $0x48] sm:$0xff] %vm1576, %v1223
        %1587 = vst.msk [vmem:[%s357 + $0x50] sm:$0xff] %vm1576, %v1239
        %1588 = vst.msk [vmem:[%s357 + $0x58] sm:$0xff] %vm1576, %v1255
        %1589 = vst.msk [vmem:[%s357 + $0x60] sm:$0xff] %vm1576, %v1271
        %1590 = vst.msk [vmem:[%s357 + $0x68] sm:$0xff] %vm1576, %v1287
        %1591 = vst.msk [vmem:[%s357 + $0x70] sm:$0xff] %vm1576, %v1303
        %1592 = vst.msk [vmem:[%s357 + $0x78] sm:$0xff] %vm1576, %v1319
        %1593 = vst.msk [vmem:[%s357 + $0x80] sm:$0xff] %vm1576, %v1335
        %1594 = vst.msk [vmem:[%s357 + $0x88] sm:$0xff] %vm1576, %v1351
        %1595 = vst.msk [vmem:[%s357 + $0x90] sm:$0xff] %vm1576, %v1367
        %1596 = vst.msk [vmem:[%s357 + $0x98] sm:$0xff] %vm1576, %v1383
        %1597 = vst.msk [vmem:[%s357 + $0xa0] sm:$0xff] %vm1576, %v1399
        %1598 = vst.msk [vmem:[%s357 + $0xa8] sm:$0xff] %vm1576, %v1415
        %1599 = vst.msk [vmem:[%s357 + $0xb0] sm:$0xff] %vm1576, %v1431
        %1600 = vst.msk [vmem:[%s357 + $0xb8] sm:$0xff] %vm1576, %v1447
        %1601 = vst.msk [vmem:[%s357 + $0xc0] sm:$0xff] %vm1576, %v1463
        %1602 = vst.msk [vmem:[%s357 + $0xc8] sm:$0xff] %vm1576, %v1479
        %1603 = vst.msk [vmem:[%s357 + $0xd0] sm:$0xff] %vm1576, %v1495
        %1604 = vst.msk [vmem:[%s357 + $0xd8] sm:$0xff] %vm1576, %v1511
        %1605 = vst.msk [vmem:[%s357 + $0xe0] sm:$0xff] %vm1576, %v1527
        %1606 = vst.msk [vmem:[%s357 + $0xe8] sm:$0xff] %vm1576, %v1543
        %1607 = vst.msk [vmem:[%s357 + $0xf0] sm:$0xff] %vm1576, %v1559
        %1608 = vst.msk [vmem:[%s357 + $0xf8] sm:$0xff] %vm1576, %v1575
        %s1609 = smul.u32 %s29, 256
        %v1610 = vlaneseq
        %v1611 = vshrl.u32 %v1610, 7
        %v1612 = vadd.s32 %v1611, 8
        %v1613 = vadd.s32 %v1611, 16
        %v1614 = vadd.s32 %v1611, 24
        %v1615 = vadd.s32 %v1611, 32
        %v1616 = vadd.s32 %v1611, 40
        %v1617 = vadd.s32 %v1611, 48
        %v1618 = vadd.s32 %v1611, 56
        %v1619 = vadd.s32 %v1611, 64
        %v1620 = vadd.s32 %v1611, 72
        %v1621 = vadd.s32 %v1611, 80
        %v1622 = vadd.s32 %v1611, 88
        %v1623 = vadd.s32 %v1611, 96
        %v1624 = vadd.s32 %v1611, 104
        %v1625 = vadd.s32 %v1611, 112
        %v1626 = vadd.s32 %v1611, 120
        %v1627 = vadd.s32 %v1611, 128
        %v1628 = vadd.s32 %v1611, 136
        %v1629 = vadd.s32 %v1611, 144
        %v1630 = vadd.s32 %v1611, 152
        %v1631 = vadd.s32 %v1611, 160
        %v1632 = vadd.s32 %v1611, 168
        %v1633 = vadd.s32 %v1611, 176
        %v1634 = vadd.s32 %v1611, 184
        %v1635 = vadd.s32 %v1611, 192
        %v1636 = vadd.s32 %v1611, 200
        %v1637 = vadd.s32 %v1611, 208
        %v1638 = vadd.s32 %v1611, 216
        %v1639 = vadd.s32 %v1611, 224
        %v1640 = vadd.s32 %v1611, 232
        %v1641 = vadd.s32 %v1611, 240
        %v1642 = vadd.s32 %v1611, 248
        %v1643 = vstv %s1609
        %v1644 = vadd.s32 %v1611, %v1643
        %v1645 = vadd.s32 %v1612, %v1643
        %v1646 = vadd.s32 %v1613, %v1643
        %v1647 = vadd.s32 %v1614, %v1643
        %v1648 = vadd.s32 %v1615, %v1643
        %v1649 = vadd.s32 %v1616, %v1643
        %v1650 = vadd.s32 %v1617, %v1643
        %v1651 = vadd.s32 %v1618, %v1643
        %v1652 = vadd.s32 %v1619, %v1643
        %v1653 = vadd.s32 %v1620, %v1643
        %v1654 = vadd.s32 %v1621, %v1643
        %v1655 = vadd.s32 %v1622, %v1643
        %v1656 = vadd.s32 %v1623, %v1643
        %v1657 = vadd.s32 %v1624, %v1643
        %v1658 = vadd.s32 %v1625, %v1643
        %v1659 = vadd.s32 %v1626, %v1643
        %v1660 = vadd.s32 %v1627, %v1643
        %v1661 = vadd.s32 %v1628, %v1643
        %v1662 = vadd.s32 %v1629, %v1643
        %v1663 = vadd.s32 %v1630, %v1643
        %v1664 = vadd.s32 %v1631, %v1643
        %v1665 = vadd.s32 %v1632, %v1643
        %v1666 = vadd.s32 %v1633, %v1643
        %v1667 = vadd.s32 %v1634, %v1643
        %v1668 = vadd.s32 %v1635, %v1643
        %v1669 = vadd.s32 %v1636, %v1643
        %v1670 = vadd.s32 %v1637, %v1643
        %v1671 = vadd.s32 %v1638, %v1643
        %v1672 = vadd.s32 %v1639, %v1643
        %v1673 = vadd.s32 %v1640, %v1643
        %v1674 = vadd.s32 %v1641, %v1643
        %v1675 = vadd.s32 %v1642, %v1643
        %vm1676 = vcmp.lt.s32.totalorder %v1644, 300
        %vm1677 = vcmp.lt.s32.totalorder %v1645, 300
        %vm1678 = vcmp.lt.s32.totalorder %v1646, 300
        %vm1679 = vcmp.lt.s32.totalorder %v1647, 300
        %vm1680 = vcmp.lt.s32.totalorder %v1648, 300
        %vm1681 = vcmp.lt.s32.totalorder %v1649, 300
        %vm1682 = vcmp.lt.s32.totalorder %v1650, 300
        %vm1683 = vcmp.lt.s32.totalorder %v1651, 300
        %vm1684 = vcmp.lt.s32.totalorder %v1652, 300
        %vm1685 = vcmp.lt.s32.totalorder %v1653, 300
        %vm1686 = vcmp.lt.s32.totalorder %v1654, 300
        %vm1687 = vcmp.lt.s32.totalorder %v1655, 300
        %vm1688 = vcmp.lt.s32.totalorder %v1656, 300
        %vm1689 = vcmp.lt.s32.totalorder %v1657, 300
        %vm1690 = vcmp.lt.s32.totalorder %v1658, 300
        %vm1691 = vcmp.lt.s32.totalorder %v1659, 300
        %vm1692 = vcmp.lt.s32.totalorder %v1660, 300
        %vm1693 = vcmp.lt.s32.totalorder %v1661, 300
        %vm1694 = vcmp.lt.s32.totalorder %v1662, 300
        %vm1695 = vcmp.lt.s32.totalorder %v1663, 300
        %vm1696 = vcmp.lt.s32.totalorder %v1664, 300
        %vm1697 = vcmp.lt.s32.totalorder %v1665, 300
        %vm1698 = vcmp.lt.s32.totalorder %v1666, 300
        %vm1699 = vcmp.lt.s32.totalorder %v1667, 300
        %vm1700 = vcmp.lt.s32.totalorder %v1668, 300
        %vm1701 = vcmp.lt.s32.totalorder %v1669, 300
        %vm1702 = vcmp.lt.s32.totalorder %v1670, 300
        %vm1703 = vcmp.lt.s32.totalorder %v1671, 300
        %vm1704 = vcmp.lt.s32.totalorder %v1672, 300
        %vm1705 = vcmp.lt.s32.totalorder %v1673, 300
        %vm1706 = vcmp.lt.s32.totalorder %v1674, 300
        %vm1707 = vcmp.lt.s32.totalorder %v1675, 300
        %v1708 = vsel %vm1676, 1, 0
        %v1709 = vsel %vm1677, 1, 0
        %v1710 = vsel %vm1678, 1, 0
        %v1711 = vsel %vm1679, 1, 0
        %v1712 = vsel %vm1680, 1, 0
        %v1713 = vsel %vm1681, 1, 0
        %v1714 = vsel %vm1682, 1, 0
        %v1715 = vsel %vm1683, 1, 0
        %v1716 = vsel %vm1684, 1, 0
        %v1717 = vsel %vm1685, 1, 0
        %v1718 = vsel %vm1686, 1, 0
        %v1719 = vsel %vm1687, 1, 0
        %v1720 = vsel %vm1688, 1, 0
        %v1721 = vsel %vm1689, 1, 0
        %v1722 = vsel %vm1690, 1, 0
        %v1723 = vsel %vm1691, 1, 0
        %v1724 = vsel %vm1692, 1, 0
        %v1725 = vsel %vm1693, 1, 0
        %v1726 = vsel %vm1694, 1, 0
        %v1727 = vsel %vm1695, 1, 0
        %v1728 = vsel %vm1696, 1, 0
        %v1729 = vsel %vm1697, 1, 0
        %v1730 = vsel %vm1698, 1, 0
        %v1731 = vsel %vm1699, 1, 0
        %v1732 = vsel %vm1700, 1, 0
        %v1733 = vsel %vm1701, 1, 0
        %v1734 = vsel %vm1702, 1, 0
        %v1735 = vsel %vm1703, 1, 0
        %v1736 = vsel %vm1704, 1, 0
        %v1737 = vsel %vm1705, 1, 0
        %v1738 = vsel %vm1706, 1, 0
        %v1739 = vsel %vm1707, 1, 0
        %v1740 = vcvt.s32.f32 %v1708
        %v1741 = vcvt.s32.f32 %v1709
        %v1742 = vcvt.s32.f32 %v1710
        %v1743 = vcvt.s32.f32 %v1711
        %v1744 = vcvt.s32.f32 %v1712
        %v1745 = vcvt.s32.f32 %v1713
        %v1746 = vcvt.s32.f32 %v1714
        %v1747 = vcvt.s32.f32 %v1715
        %v1748 = vcvt.s32.f32 %v1716
        %v1749 = vcvt.s32.f32 %v1717
        %v1750 = vcvt.s32.f32 %v1718
        %v1751 = vcvt.s32.f32 %v1719
        %v1752 = vcvt.s32.f32 %v1720
        %v1753 = vcvt.s32.f32 %v1721
        %v1754 = vcvt.s32.f32 %v1722
        %v1755 = vcvt.s32.f32 %v1723
        %v1756 = vcvt.s32.f32 %v1724
        %v1757 = vcvt.s32.f32 %v1725
        %v1758 = vcvt.s32.f32 %v1726
        %v1759 = vcvt.s32.f32 %v1727
        %v1760 = vcvt.s32.f32 %v1728
        %v1761 = vcvt.s32.f32 %v1729
        %v1762 = vcvt.s32.f32 %v1730
        %v1763 = vcvt.s32.f32 %v1731
        %v1764 = vcvt.s32.f32 %v1732
        %v1765 = vcvt.s32.f32 %v1733
        %v1766 = vcvt.s32.f32 %v1734
        %v1767 = vcvt.s32.f32 %v1735
        %v1768 = vcvt.s32.f32 %v1736
        %v1769 = vcvt.s32.f32 %v1737
        %v1770 = vcvt.s32.f32 %v1738
        %v1771 = vcvt.s32.f32 %v1739
        %vm1772 = vcmp.eq.s32.totalorder %v934, %v1079
        %vm1773 = vcmp.eq.s32.totalorder %v935, %v1079
        %vm1774 = vcmp.eq.s32.totalorder %v934, %v1095
        %vm1775 = vcmp.eq.s32.totalorder %v935, %v1095
        %vm1776 = vcmp.eq.s32.totalorder %v934, %v1111
        %vm1777 = vcmp.eq.s32.totalorder %v935, %v1111
        %vm1778 = vcmp.eq.s32.totalorder %v934, %v1127
        %vm1779 = vcmp.eq.s32.totalorder %v935, %v1127
        %vm1780 = vcmp.eq.s32.totalorder %v934, %v1143
        %vm1781 = vcmp.eq.s32.totalorder %v935, %v1143
        %vm1782 = vcmp.eq.s32.totalorder %v934, %v1159
        %vm1783 = vcmp.eq.s32.totalorder %v935, %v1159
        %vm1784 = vcmp.eq.s32.totalorder %v934, %v1175
        %vm1785 = vcmp.eq.s32.totalorder %v935, %v1175
        %vm1786 = vcmp.eq.s32.totalorder %v934, %v1191
        %vm1787 = vcmp.eq.s32.totalorder %v935, %v1191
        %vm1788 = vcmp.eq.s32.totalorder %v934, %v1207
        %vm1789 = vcmp.eq.s32.totalorder %v935, %v1207
        %vm1790 = vcmp.eq.s32.totalorder %v934, %v1223
        %vm1791 = vcmp.eq.s32.totalorder %v935, %v1223
        %vm1792 = vcmp.eq.s32.totalorder %v934, %v1239
        %vm1793 = vcmp.eq.s32.totalorder %v935, %v1239
        %vm1794 = vcmp.eq.s32.totalorder %v934, %v1255
        %vm1795 = vcmp.eq.s32.totalorder %v935, %v1255
        %vm1796 = vcmp.eq.s32.totalorder %v934, %v1271
        %vm1797 = vcmp.eq.s32.totalorder %v935, %v1271
        %vm1798 = vcmp.eq.s32.totalorder %v934, %v1287
        %vm1799 = vcmp.eq.s32.totalorder %v935, %v1287
        %vm1800 = vcmp.eq.s32.totalorder %v934, %v1303
        %vm1801 = vcmp.eq.s32.totalorder %v935, %v1303
        %vm1802 = vcmp.eq.s32.totalorder %v934, %v1319
        %vm1803 = vcmp.eq.s32.totalorder %v935, %v1319
        %vm1804 = vcmp.eq.s32.totalorder %v934, %v1335
        %vm1805 = vcmp.eq.s32.totalorder %v935, %v1335
        %vm1806 = vcmp.eq.s32.totalorder %v934, %v1351
        %vm1807 = vcmp.eq.s32.totalorder %v935, %v1351
        %vm1808 = vcmp.eq.s32.totalorder %v934, %v1367
        %vm1809 = vcmp.eq.s32.totalorder %v935, %v1367
        %vm1810 = vcmp.eq.s32.totalorder %v934, %v1383
        %vm1811 = vcmp.eq.s32.totalorder %v935, %v1383
        %vm1812 = vcmp.eq.s32.totalorder %v934, %v1399
        %vm1813 = vcmp.eq.s32.totalorder %v935, %v1399
        %vm1814 = vcmp.eq.s32.totalorder %v934, %v1415
        %vm1815 = vcmp.eq.s32.totalorder %v935, %v1415
        %vm1816 = vcmp.eq.s32.totalorder %v934, %v1431
        %vm1817 = vcmp.eq.s32.totalorder %v935, %v1431
        %vm1818 = vcmp.eq.s32.totalorder %v934, %v1447
        %vm1819 = vcmp.eq.s32.totalorder %v935, %v1447
        %vm1820 = vcmp.eq.s32.totalorder %v934, %v1463
        %vm1821 = vcmp.eq.s32.totalorder %v935, %v1463
        %vm1822 = vcmp.eq.s32.totalorder %v934, %v1479
        %vm1823 = vcmp.eq.s32.totalorder %v935, %v1479
        %vm1824 = vcmp.eq.s32.totalorder %v934, %v1495
        %vm1825 = vcmp.eq.s32.totalorder %v935, %v1495
        %vm1826 = vcmp.eq.s32.totalorder %v934, %v1511
        %vm1827 = vcmp.eq.s32.totalorder %v935, %v1511
        %vm1828 = vcmp.eq.s32.totalorder %v934, %v1527
        %vm1829 = vcmp.eq.s32.totalorder %v935, %v1527
        %vm1830 = vcmp.eq.s32.totalorder %v934, %v1543
        %vm1831 = vcmp.eq.s32.totalorder %v935, %v1543
        %vm1832 = vcmp.eq.s32.totalorder %v934, %v1559
        %vm1833 = vcmp.eq.s32.totalorder %v935, %v1559
        %vm1834 = vcmp.eq.s32.totalorder %v934, %v1575
        %vm1835 = vcmp.eq.s32.totalorder %v935, %v1575
        %v1836 = vsel %vm1772, %v1740, 0.0
        %v1837 = vsel %vm1773, %v1740, 0.0
        %v1838 = vsel %vm1774, %v1741, 0.0
        %v1839 = vsel %vm1775, %v1741, 0.0
        %v1840 = vsel %vm1776, %v1742, 0.0
        %v1841 = vsel %vm1777, %v1742, 0.0
        %v1842 = vsel %vm1778, %v1743, 0.0
        %v1843 = vsel %vm1779, %v1743, 0.0
        %v1844 = vsel %vm1780, %v1744, 0.0
        %v1845 = vsel %vm1781, %v1744, 0.0
        %v1846 = vsel %vm1782, %v1745, 0.0
        %v1847 = vsel %vm1783, %v1745, 0.0
        %v1848 = vsel %vm1784, %v1746, 0.0
        %v1849 = vsel %vm1785, %v1746, 0.0
        %v1850 = vsel %vm1786, %v1747, 0.0
        %v1851 = vsel %vm1787, %v1747, 0.0
        %v1852 = vsel %vm1788, %v1748, 0.0
        %v1853 = vsel %vm1789, %v1748, 0.0
        %v1854 = vsel %vm1790, %v1749, 0.0
        %v1855 = vsel %vm1791, %v1749, 0.0
        %v1856 = vsel %vm1792, %v1750, 0.0
        %v1857 = vsel %vm1793, %v1750, 0.0
        %v1858 = vsel %vm1794, %v1751, 0.0
        %v1859 = vsel %vm1795, %v1751, 0.0
        %v1860 = vsel %vm1796, %v1752, 0.0
        %v1861 = vsel %vm1797, %v1752, 0.0
        %v1862 = vsel %vm1798, %v1753, 0.0
        %v1863 = vsel %vm1799, %v1753, 0.0
        %v1864 = vsel %vm1800, %v1754, 0.0
        %v1865 = vsel %vm1801, %v1754, 0.0
        %v1866 = vsel %vm1802, %v1755, 0.0
        %v1867 = vsel %vm1803, %v1755, 0.0
        %v1868 = vsel %vm1804, %v1756, 0.0
        %v1869 = vsel %vm1805, %v1756, 0.0
        %v1870 = vsel %vm1806, %v1757, 0.0
        %v1871 = vsel %vm1807, %v1757, 0.0
        %v1872 = vsel %vm1808, %v1758, 0.0
        %v1873 = vsel %vm1809, %v1758, 0.0
        %v1874 = vsel %vm1810, %v1759, 0.0
        %v1875 = vsel %vm1811, %v1759, 0.0
        %v1876 = vsel %vm1812, %v1760, 0.0
        %v1877 = vsel %vm1813, %v1760, 0.0
        %v1878 = vsel %vm1814, %v1761, 0.0
        %v1879 = vsel %vm1815, %v1761, 0.0
        %v1880 = vsel %vm1816, %v1762, 0.0
        %v1881 = vsel %vm1817, %v1762, 0.0
        %v1882 = vsel %vm1818, %v1763, 0.0
        %v1883 = vsel %vm1819, %v1763, 0.0
        %v1884 = vsel %vm1820, %v1764, 0.0
        %v1885 = vsel %vm1821, %v1764, 0.0
        %v1886 = vsel %vm1822, %v1765, 0.0
        %v1887 = vsel %vm1823, %v1765, 0.0
        %v1888 = vsel %vm1824, %v1766, 0.0
        %v1889 = vsel %vm1825, %v1766, 0.0
        %v1890 = vsel %vm1826, %v1767, 0.0
        %v1891 = vsel %vm1827, %v1767, 0.0
        %v1892 = vsel %vm1828, %v1768, 0.0
        %v1893 = vsel %vm1829, %v1768, 0.0
        %v1894 = vsel %vm1830, %v1769, 0.0
        %v1895 = vsel %vm1831, %v1769, 0.0
        %v1896 = vsel %vm1832, %v1770, 0.0
        %v1897 = vsel %vm1833, %v1770, 0.0
        %v1898 = vsel %vm1834, %v1771, 0.0
        %v1899 = vsel %vm1835, %v1771, 0.0
        %v1900 = vld [vmem:[#allocation7] sm:$0xff]
        %v1901 = vld [vmem:[#allocation7 + $0x8] sm:$0xff]
        %v1902 = vld [vmem:[#allocation7 + $0x10] sm:$0xff]
        %v1903 = vld [vmem:[#allocation7 + $0x18] sm:$0xff]
        %v1904 = vld [vmem:[#allocation7 + $0x20] sm:$0xff]
        %v1905 = vld [vmem:[#allocation7 + $0x28] sm:$0xff]
        %v1906 = vld [vmem:[#allocation7 + $0x30] sm:$0xff]
        %v1907 = vld [vmem:[#allocation7 + $0x38] sm:$0xff]
        %v1908 = vld [vmem:[#allocation7 + $0x40] sm:$0xff]
        %v1909 = vld [vmem:[#allocation7 + $0x48] sm:$0xff]
        %v1910 = vld [vmem:[#allocation7 + $0x50] sm:$0xff]
        %v1911 = vld [vmem:[#allocation7 + $0x58] sm:$0xff]
        %v1912 = vld [vmem:[#allocation7 + $0x60] sm:$0xff]
        %v1913 = vld [vmem:[#allocation7 + $0x68] sm:$0xff]
        %v1914 = vld [vmem:[#allocation7 + $0x70] sm:$0xff]
        %v1915 = vld [vmem:[#allocation7 + $0x78] sm:$0xff]
        %v1916 = vld [vmem:[#allocation7 + $0x80] sm:$0xff]
        %v1917 = vld [vmem:[#allocation7 + $0x88] sm:$0xff]
        %v1918 = vld [vmem:[#allocation7 + $0x90] sm:$0xff]
        %v1919 = vld [vmem:[#allocation7 + $0x98] sm:$0xff]
        %v1920 = vld [vmem:[#allocation7 + $0xa0] sm:$0xff]
        %v1921 = vld [vmem:[#allocation7 + $0xa8] sm:$0xff]
        %v1922 = vld [vmem:[#allocation7 + $0xb0] sm:$0xff]
        %v1923 = vld [vmem:[#allocation7 + $0xb8] sm:$0xff]
        %v1924 = vld [vmem:[#allocation7 + $0xc0] sm:$0xff]
        %v1925 = vld [vmem:[#allocation7 + $0xc8] sm:$0xff]
        %v1926 = vld [vmem:[#allocation7 + $0xd0] sm:$0xff]
        %v1927 = vld [vmem:[#allocation7 + $0xd8] sm:$0xff]
        %v1928 = vld [vmem:[#allocation7 + $0xe0] sm:$0xff]
        %v1929 = vld [vmem:[#allocation7 + $0xe8] sm:$0xff]
        %v1930 = vld [vmem:[#allocation7 + $0xf0] sm:$0xff]
        %v1931 = vld [vmem:[#allocation7 + $0xf8] sm:$0xff]
        %1932 = vmatprep.subr.mxu0 0.0
        %1933 = vmatpush1.msra.mxu0 %v1900
        %1934 = vmatprep.subr.mxu0 0.0
        %1935 = vmatpush1.msra.mxu0 %v1901
        %1936 = vmatprep.subr.mxu0 0.0
        %1937 = vmatpush1.msra.mxu0 %v1902
        %1938 = vmatprep.subr.mxu0 0.0
        %1939 = vmatpush1.msra.mxu0 %v1903
        %1940 = vmatprep.subr.mxu0 0.0
        %1941 = vmatpush1.msra.mxu0 %v1904
        %1942 = vmatprep.subr.mxu0 0.0
        %1943 = vmatpush1.msra.mxu0 %v1905
        %1944 = vmatprep.subr.mxu0 0.0
        %1945 = vmatpush1.msra.mxu0 %v1906
        %1946 = vmatprep.subr.mxu0 0.0
        %1947 = vmatpush1.msra.mxu0 %v1907
        %1948 = vmatprep.subr.mxu0 0.0
        %1949 = vmatpush1.msra.mxu0 %v1908
        %1950 = vmatprep.subr.mxu0 0.0
        %1951 = vmatpush1.msra.mxu0 %v1909
        %1952 = vmatprep.subr.mxu0 0.0
        %1953 = vmatpush1.msra.mxu0 %v1910
        %1954 = vmatprep.subr.mxu0 0.0
        %1955 = vmatpush1.msra.mxu0 %v1911
        %1956 = vmatprep.subr.mxu0 0.0
        %1957 = vmatpush1.msra.mxu0 %v1912
        %1958 = vmatprep.subr.mxu0 0.0
        %1959 = vmatpush1.msra.mxu0 %v1913
        %1960 = vmatprep.subr.mxu0 0.0
        %1961 = vmatpush1.msra.mxu0 %v1914
        %1962 = vmatprep.subr.mxu0 0.0
        %1963 = vmatpush1.msra.mxu0 %v1915
        %1964 = vmatprep.subr.mxu0 0.0
        %1965 = vmatpush1.msra.mxu0 %v1916
        %1966 = vmatprep.subr.mxu0 0.0
        %1967 = vmatpush1.msra.mxu0 %v1917
        %1968 = vmatprep.subr.mxu0 0.0
        %1969 = vmatpush1.msra.mxu0 %v1918
        %1970 = vmatprep.subr.mxu0 0.0
        %1971 = vmatpush1.msra.mxu0 %v1919
        %1972 = vmatprep.subr.mxu0 0.0
        %1973 = vmatpush1.msra.mxu0 %v1920
        %1974 = vmatprep.subr.mxu0 0.0
        %1975 = vmatpush1.msra.mxu0 %v1921
        %1976 = vmatprep.subr.mxu0 0.0
        %1977 = vmatpush1.msra.mxu0 %v1922
        %1978 = vmatprep.subr.mxu0 0.0
        %1979 = vmatpush1.msra.mxu0 %v1923
        %1980 = vmatprep.subr.mxu0 0.0
        %1981 = vmatpush1.msra.mxu0 %v1924
        %1982 = vmatprep.subr.mxu0 0.0
        %1983 = vmatpush1.msra.mxu0 %v1925
        %1984 = vmatprep.subr.mxu0 0.0
        %1985 = vmatpush1.msra.mxu0 %v1926
        %1986 = vmatprep.subr.mxu0 0.0
        %1987 = vmatpush1.msra.mxu0 %v1927
        %1988 = vmatprep.subr.mxu0 0.0
        %1989 = vmatpush1.msra.mxu0 %v1928
        %1990 = vmatprep.subr.mxu0 0.0
        %1991 = vmatpush1.msra.mxu0 %v1929
        %1992 = vmatprep.subr.mxu0 0.0
        %1993 = vmatpush1.msra.mxu0 %v1930
        %1994 = vmatprep.subr.mxu0 0.0
        %1995 = vmatpush1.msra.mxu0 %v1931
        %1996 = vmatprep.mubr.f32.mxu0 %v1837
        %1997 = vmatmul.mubr.f32.gmra.mrb[0].mxu0 %v1836
        %v1998 = vpop.f32.mrb[0].mxu0
        %v1999 = vadd.f32 0.0, %v1998
        %v2000 = vpop.f32.mrb[0].mxu0
        %2001 = vmatprep.mubr.f32.mxu0 %v1839
        %2002 = vmatmul.mubr.f32.gmra.mrb[0].mxu0 %v1838
        %v2003 = vpop.f32.mrb[0].mxu0
        %v2004 = vadd.f32 0.0, %v2003
        %v2005 = vpop.f32.mrb[0].mxu0
        %2006 = vmatprep.mubr.f32.mxu0 %v1841
        %2007 = vmatmul.mubr.f32.gmra.mrb[0].mxu0 %v1840
        %v2008 = vpop.f32.mrb[0].mxu0
        %v2009 = vadd.f32 0.0, %v2008
        %v2010 = vpop.f32.mrb[0].mxu0
        %2011 = vmatprep.mubr.f32.mxu0 %v1843
        %2012 = vmatmul.mubr.f32.gmra.mrb[0].mxu0 %v1842
        %v2013 = vpop.f32.mrb[0].mxu0
        %v2014 = vadd.f32 0.0, %v2013
        %v2015 = vpop.f32.mrb[0].mxu0
        %2016 = vmatprep.mubr.f32.mxu0 %v1845
        %2017 = vmatmul.mubr.f32.gmra.mrb[0].mxu0 %v1844
        %v2018 = vpop.f32.mrb[0].mxu0
        %v2019 = vadd.f32 0.0, %v2018
        %v2020 = vpop.f32.mrb[0].mxu0
        %2021 = vmatprep.mubr.f32.mxu0 %v1847
        %2022 = vmatmul.mubr.f32.gmra.mrb[0].mxu0 %v1846
        %v2023 = vpop.f32.mrb[0].mxu0
        %v2024 = vadd.f32 0.0, %v2023
        %v2025 = vpop.f32.mrb[0].mxu0
        %2026 = vmatprep.mubr.f32.mxu0 %v1849
        %2027 = vmatmul.mubr.f32.gmra.mrb[0].mxu0 %v1848
        %v2028 = vpop.f32.mrb[0].mxu0
        %v2029 = vadd.f32 0.0, %v2028
        %v2030 = vpop.f32.mrb[0].mxu0
        %2031 = vmatprep.mubr.f32.mxu0 %v1851
        %2032 = vmatmul.mubr.f32.gmra.mrb[0].mxu0 %v1850
        %v2033 = vpop.f32.mrb[0].mxu0
        %v2034 = vadd.f32 0.0, %v2033
        %v2035 = vpop.f32.mrb[0].mxu0
        %2036 = vmatprep.mubr.f32.mxu0 %v1853
        %2037 = vmatmul.mubr.f32.gmra.mrb[0].mxu0 %v1852
        %v2038 = vpop.f32.mrb[0].mxu0
        %v2039 = vadd.f32 0.0, %v2038
        %v2040 = vpop.f32.mrb[0].mxu0
        %2041 = vmatprep.mubr.f32.mxu0 %v1855
        %2042 = vmatmul.mubr.f32.gmra.mrb[0].mxu0 %v1854
        %v2043 = vpop.f32.mrb[0].mxu0
        %v2044 = vadd.f32 0.0, %v2043
        %v2045 = vpop.f32.mrb[0].mxu0
        %2046 = vmatprep.mubr.f32.mxu0 %v1857
        %2047 = vmatmul.mubr.f32.gmra.mrb[0].mxu0 %v1856
        %v2048 = vpop.f32.mrb[0].mxu0
        %v2049 = vadd.f32 0.0, %v2048
        %v2050 = vpop.f32.mrb[0].mxu0
        %2051 = vmatprep.mubr.f32.mxu0 %v1859
        %2052 = vmatmul.mubr.f32.gmra.mrb[0].mxu0 %v1858
        %v2053 = vpop.f32.mrb[0].mxu0
        %v2054 = vadd.f32 0.0, %v2053
        %v2055 = vpop.f32.mrb[0].mxu0
        %2056 = vmatprep.mubr.f32.mxu0 %v1861
        %2057 = vmatmul.mubr.f32.gmra.mrb[0].mxu0 %v1860
        %v2058 = vpop.f32.mrb[0].mxu0
        %v2059 = vadd.f32 0.0, %v2058
        %v2060 = vpop.f32.mrb[0].mxu0
        %2061 = vmatprep.mubr.f32.mxu0 %v1863
        %2062 = vmatmul.mubr.f32.gmra.mrb[0].mxu0 %v1862
        %v2063 = vpop.f32.mrb[0].mxu0
        %v2064 = vadd.f32 0.0, %v2063
        %v2065 = vpop.f32.mrb[0].mxu0
        %2066 = vmatprep.mubr.f32.mxu0 %v1865
        %2067 = vmatmul.mubr.f32.gmra.mrb[0].mxu0 %v1864
        %v2068 = vpop.f32.mrb[0].mxu0
        %v2069 = vadd.f32 0.0, %v2068
        %v2070 = vpop.f32.mrb[0].mxu0
        %2071 = vmatprep.mubr.f32.mxu0 %v1867
        %2072 = vmatmul.mubr.f32.gmra.mrb[0].mxu0 %v1866
        %v2073 = vpop.f32.mrb[0].mxu0
        %v2074 = vadd.f32 0.0, %v2073
        %v2075 = vpop.f32.mrb[0].mxu0
        %2076 = vmatprep.mubr.f32.mxu0 %v1869
        %2077 = vmatmul.mubr.f32.gmra.mrb[0].mxu0 %v1868
        %v2078 = vpop.f32.mrb[0].mxu0
        %v2079 = vadd.f32 0.0, %v2078
        %v2080 = vpop.f32.mrb[0].mxu0
        %2081 = vmatprep.mubr.f32.mxu0 %v1871
        %2082 = vmatmul.mubr.f32.gmra.mrb[0].mxu0 %v1870
        %v2083 = vpop.f32.mrb[0].mxu0
        %v2084 = vadd.f32 0.0, %v2083
        %v2085 = vpop.f32.mrb[0].mxu0
        %2086 = vmatprep.mubr.f32.mxu0 %v1873
        %2087 = vmatmul.mubr.f32.gmra.mrb[0].mxu0 %v1872
        %v2088 = vpop.f32.mrb[0].mxu0
        %v2089 = vadd.f32 0.0, %v2088
        %v2090 = vpop.f32.mrb[0].mxu0
        %2091 = vmatprep.mubr.f32.mxu0 %v1875
        %2092 = vmatmul.mubr.f32.gmra.mrb[0].mxu0 %v1874
        %v2093 = vpop.f32.mrb[0].mxu0
        %v2094 = vadd.f32 0.0, %v2093
        %v2095 = vpop.f32.mrb[0].mxu0
        %2096 = vmatprep.mubr.f32.mxu0 %v1877
        %2097 = vmatmul.mubr.f32.gmra.mrb[0].mxu0 %v1876
        %v2098 = vpop.f32.mrb[0].mxu0
        %v2099 = vadd.f32 0.0, %v2098
        %v2100 = vpop.f32.mrb[0].mxu0
        %2101 = vmatprep.mubr.f32.mxu0 %v1879
        %2102 = vmatmul.mubr.f32.gmra.mrb[0].mxu0 %v1878
        %v2103 = vpop.f32.mrb[0].mxu0
        %v2104 = vadd.f32 0.0, %v2103
        %v2105 = vpop.f32.mrb[0].mxu0
        %2106 = vmatprep.mubr.f32.mxu0 %v1881
        %2107 = vmatmul.mubr.f32.gmra.mrb[0].mxu0 %v1880
        %v2108 = vpop.f32.mrb[0].mxu0
        %v2109 = vadd.f32 0.0, %v2108
        %v2110 = vpop.f32.mrb[0].mxu0
        %2111 = vmatprep.mubr.f32.mxu0 %v1883
        %2112 = vmatmul.mubr.f32.gmra.mrb[0].mxu0 %v1882
        %v2113 = vpop.f32.mrb[0].mxu0
        %v2114 = vadd.f32 0.0, %v2113
        %v2115 = vpop.f32.mrb[0].mxu0
        %2116 = vmatprep.mubr.f32.mxu0 %v1885
        %2117 = vmatmul.mubr.f32.gmra.mrb[0].mxu0 %v1884
        %v2118 = vpop.f32.mrb[0].mxu0
        %v2119 = vadd.f32 0.0, %v2118
        %v2120 = vpop.f32.mrb[0].mxu0
        %2121 = vmatprep.mubr.f32.mxu0 %v1887
        %2122 = vmatmul.mubr.f32.gmra.mrb[0].mxu0 %v1886
        %v2123 = vpop.f32.mrb[0].mxu0
        %v2124 = vadd.f32 0.0, %v2123
        %v2125 = vpop.f32.mrb[0].mxu0
        %2126 = vmatprep.mubr.f32.mxu0 %v1889
        %2127 = vmatmul.mubr.f32.gmra.mrb[0].mxu0 %v1888
        %v2128 = vpop.f32.mrb[0].mxu0
        %v2129 = vadd.f32 0.0, %v2128
        %v2130 = vpop.f32.mrb[0].mxu0
        %2131 = vmatprep.mubr.f32.mxu0 %v1891
        %2132 = vmatmul.mubr.f32.gmra.mrb[0].mxu0 %v1890
        %v2133 = vpop.f32.mrb[0].mxu0
        %v2134 = vadd.f32 0.0, %v2133
        %v2135 = vpop.f32.mrb[0].mxu0
        %2136 = vmatprep.mubr.f32.mxu0 %v1893
        %2137 = vmatmul.mubr.f32.gmra.mrb[0].mxu0 %v1892
        %v2138 = vpop.f32.mrb[0].mxu0
        %v2139 = vadd.f32 0.0, %v2138
        %v2140 = vpop.f32.mrb[0].mxu0
        %2141 = vmatprep.mubr.f32.mxu0 %v1895
        %2142 = vmatmul.mubr.f32.gmra.mrb[0].mxu0 %v1894
        %v2143 = vpop.f32.mrb[0].mxu0
        %v2144 = vadd.f32 0.0, %v2143
        %v2145 = vpop.f32.mrb[0].mxu0
        %2146 = vmatprep.mubr.f32.mxu0 %v1897
        %2147 = vmatmul.mubr.f32.gmra.mrb[0].mxu0 %v1896
        %v2148 = vpop.f32.mrb[0].mxu0
        %v2149 = vadd.f32 0.0, %v2148
        %v2150 = vpop.f32.mrb[0].mxu0
        %2151 = vmatprep.mubr.f32.mxu0 %v1899
        %2152 = vmatmul.mubr.f32.gmra.mrb[0].mxu0 %v1898
        %v2153 = vpop.f32.mrb[0].mxu0
        %v2154 = vadd.f32 0.0, %v2153
        %v2155 = vpop.f32.mrb[0].mxu0
        %2156 = vdwg.mxu0
        %2157 = vst [vmem:[%s329] sm:$0xff] %v1999
        %2158 = vst [vmem:[%s329 + $0x8] sm:$0xff] %v2004
        %2159 = vst [vmem:[%s329 + $0x10] sm:$0xff] %v2009
        %2160 = vst [vmem:[%s329 + $0x18] sm:$0xff] %v2014
        %2161 = vst [vmem:[%s329 + $0x20] sm:$0xff] %v2019
        %2162 = vst [vmem:[%s329 + $0x28] sm:$0xff] %v2024
        %2163 = vst [vmem:[%s329 + $0x30] sm:$0xff] %v2029
        %2164 = vst [vmem:[%s329 + $0x38] sm:$0xff] %v2034
        %2165 = vst [vmem:[%s329 + $0x40] sm:$0xff] %v2039
        %2166 = vst [vmem:[%s329 + $0x48] sm:$0xff] %v2044
        %2167 = vst [vmem:[%s329 + $0x50] sm:$0xff] %v2049
        %2168 = vst [vmem:[%s329 + $0x58] sm:$0xff] %v2054
        %2169 = vst [vmem:[%s329 + $0x60] sm:$0xff] %v2059
        %2170 = vst [vmem:[%s329 + $0x68] sm:$0xff] %v2064
        %2171 = vst [vmem:[%s329 + $0x70] sm:$0xff] %v2069
        %2172 = vst [vmem:[%s329 + $0x78] sm:$0xff] %v2074
        %2173 = vst [vmem:[%s329 + $0x80] sm:$0xff] %v2079
        %2174 = vst [vmem:[%s329 + $0x88] sm:$0xff] %v2084
        %2175 = vst [vmem:[%s329 + $0x90] sm:$0xff] %v2089
        %2176 = vst [vmem:[%s329 + $0x98] sm:$0xff] %v2094
        %2177 = vst [vmem:[%s329 + $0xa0] sm:$0xff] %v2099
        %2178 = vst [vmem:[%s329 + $0xa8] sm:$0xff] %v2104
        %2179 = vst [vmem:[%s329 + $0xb0] sm:$0xff] %v2109
        %2180 = vst [vmem:[%s329 + $0xb8] sm:$0xff] %v2114
        %2181 = vst [vmem:[%s329 + $0xc0] sm:$0xff] %v2119
        %2182 = vst [vmem:[%s329 + $0xc8] sm:$0xff] %v2124
        %2183 = vst [vmem:[%s329 + $0xd0] sm:$0xff] %v2129
        %2184 = vst [vmem:[%s329 + $0xd8] sm:$0xff] %v2134
        %2185 = vst [vmem:[%s329 + $0xe0] sm:$0xff] %v2139
        %2186 = vst [vmem:[%s329 + $0xe8] sm:$0xff] %v2144
        %2187 = vst [vmem:[%s329 + $0xf0] sm:$0xff] %v2149
        %2188 = vst [vmem:[%s329 + $0xf8] sm:$0xff] %v2154
        %v2189 = vsub.f32 %v1999, %v360
        %v2190 = vsub.f32 %v2004, %v361
        %v2191 = vsub.f32 %v2009, %v362
        %v2192 = vsub.f32 %v2014, %v363
        %v2193 = vsub.f32 %v2019, %v364
        %v2194 = vsub.f32 %v2024, %v365
        %v2195 = vsub.f32 %v2029, %v366
        %v2196 = vsub.f32 %v2034, %v367
        %v2197 = vsub.f32 %v2039, %v368
        %v2198 = vsub.f32 %v2044, %v369
        %v2199 = vsub.f32 %v2049, %v370
        %v2200 = vsub.f32 %v2054, %v371
        %v2201 = vsub.f32 %v2059, %v372
        %v2202 = vsub.f32 %v2064, %v373
        %v2203 = vsub.f32 %v2069, %v374
        %v2204 = vsub.f32 %v2074, %v375
        %v2205 = vsub.f32 %v2079, %v376
        %v2206 = vsub.f32 %v2084, %v377
        %v2207 = vsub.f32 %v2089, %v378
        %v2208 = vsub.f32 %v2094, %v379
        %v2209 = vsub.f32 %v2099, %v380
        %v2210 = vsub.f32 %v2104, %v381
        %v2211 = vsub.f32 %v2109, %v382
        %v2212 = vsub.f32 %v2114, %v383
        %v2213 = vsub.f32 %v2119, %v384
        %v2214 = vsub.f32 %v2124, %v385
        %v2215 = vsub.f32 %v2129, %v386
        %v2216 = vsub.f32 %v2134, %v387
        %v2217 = vsub.f32 %v2139, %v388
        %v2218 = vsub.f32 %v2144, %v389
        %v2219 = vsub.f32 %v2149, %v390
        %v2220 = vsub.f32 %v2154, %v391
        %v2221 = vmul.f32 %v2189, %v2189
        %v2222 = vmul.f32 %v2190, %v2190
        %v2223 = vmul.f32 %v2191, %v2191
        %v2224 = vmul.f32 %v2192, %v2192
        %v2225 = vmul.f32 %v2193, %v2193
        %v2226 = vmul.f32 %v2194, %v2194
        %v2227 = vmul.f32 %v2195, %v2195
        %v2228 = vmul.f32 %v2196, %v2196
        %v2229 = vmul.f32 %v2197, %v2197
        %v2230 = vmul.f32 %v2198, %v2198
        %v2231 = vmul.f32 %v2199, %v2199
        %v2232 = vmul.f32 %v2200, %v2200
        %v2233 = vmul.f32 %v2201, %v2201
        %v2234 = vmul.f32 %v2202, %v2202
        %v2235 = vmul.f32 %v2203, %v2203
        %v2236 = vmul.f32 %v2204, %v2204
        %v2237 = vmul.f32 %v2205, %v2205
        %v2238 = vmul.f32 %v2206, %v2206
        %v2239 = vmul.f32 %v2207, %v2207
        %v2240 = vmul.f32 %v2208, %v2208
        %v2241 = vmul.f32 %v2209, %v2209
        %v2242 = vmul.f32 %v2210, %v2210
        %v2243 = vmul.f32 %v2211, %v2211
        %v2244 = vmul.f32 %v2212, %v2212
        %v2245 = vmul.f32 %v2213, %v2213
        %v2246 = vmul.f32 %v2214, %v2214
        %v2247 = vmul.f32 %v2215, %v2215
        %v2248 = vmul.f32 %v2216, %v2216
        %v2249 = vmul.f32 %v2217, %v2217
        %v2250 = vmul.f32 %v2218, %v2218
        %v2251 = vmul.f32 %v2219, %v2219
        %v2252 = vmul.f32 %v2220, %v2220
        %v2253 = vadd.f32 %v2221, %v2222
        %v2254 = vadd.f32 %v2253, %v2223
        %v2255 = vadd.f32 %v2254, %v2224
        %v2256 = vadd.f32 %v2255, %v2225
        %v2257 = vadd.f32 %v2256, %v2226
        %v2258 = vadd.f32 %v2257, %v2227
        %v2259 = vadd.f32 %v2258, %v2228
        %v2260 = vadd.f32 %v2259, %v2229
        %v2261 = vadd.f32 %v2260, %v2230
        %v2262 = vadd.f32 %v2261, %v2231
        %v2263 = vadd.f32 %v2262, %v2232
        %v2264 = vadd.f32 %v2263, %v2233
        %v2265 = vadd.f32 %v2264, %v2234
        %v2266 = vadd.f32 %v2265, %v2235
        %v2267 = vadd.f32 %v2266, %v2236
        %v2268 = vadd.f32 %v2267, %v2237
        %v2269 = vadd.f32 %v2268, %v2238
        %v2270 = vadd.f32 %v2269, %v2239
        %v2271 = vadd.f32 %v2270, %v2240
        %v2272 = vadd.f32 %v2271, %v2241
        %v2273 = vadd.f32 %v2272, %v2242
        %v2274 = vadd.f32 %v2273, %v2243
        %v2275 = vadd.f32 %v2274, %v2244
        %v2276 = vadd.f32 %v2275, %v2245
        %v2277 = vadd.f32 %v2276, %v2246
        %v2278 = vadd.f32 %v2277, %v2247
        %v2279 = vadd.f32 %v2278, %v2248
        %v2280 = vadd.f32 %v2279, %v2249
        %v2281 = vadd.f32 %v2280, %v2250
        %v2282 = vadd.f32 %v2281, %v2251
        %v2283 = vadd.f32 %v2282, %v2252
        %v2284 = vrot.slane %v2283, 4
        %v2285 = vadd.f32 %v2283, %v2284
        %v2286 = vrot.slane %v2285, 2
        %v2287 = vadd.f32 %v2285, %v2286
        %v2288 = vrot.slane %v2287, 1
        %v2289 = vadd.f32 %v2287, %v2288
        %2290 = vst [vmem:[%s350] sm:$0xff] %v2289
        %v2291 = vadd.f32 %v1836, %v1838
        %v2292 = vadd.f32 %v2291, %v1840
        %v2293 = vadd.f32 %v2292, %v1842
        %v2294 = vadd.f32 %v2293, %v1844
        %v2295 = vadd.f32 %v2294, %v1846
        %v2296 = vadd.f32 %v2295, %v1848
        %v2297 = vadd.f32 %v2296, %v1850
        %v2298 = vadd.f32 %v2297, %v1852
        %v2299 = vadd.f32 %v2298, %v1854
        %v2300 = vadd.f32 %v2299, %v1856
        %v2301 = vadd.f32 %v2300, %v1858
        %v2302 = vadd.f32 %v2301, %v1860
        %v2303 = vadd.f32 %v2302, %v1862
        %v2304 = vadd.f32 %v2303, %v1864
        %v2305 = vadd.f32 %v2304, %v1866
        %v2306 = vadd.f32 %v2305, %v1868
        %v2307 = vadd.f32 %v2306, %v1870
        %v2308 = vadd.f32 %v2307, %v1872
        %v2309 = vadd.f32 %v2308, %v1874
        %v2310 = vadd.f32 %v2309, %v1876
        %v2311 = vadd.f32 %v2310, %v1878
        %v2312 = vadd.f32 %v2311, %v1880
        %v2313 = vadd.f32 %v2312, %v1882
        %v2314 = vadd.f32 %v2313, %v1884
        %v2315 = vadd.f32 %v2314, %v1886
        %v2316 = vadd.f32 %v2315, %v1888
        %v2317 = vadd.f32 %v2316, %v1890
        %v2318 = vadd.f32 %v2317, %v1892
        %v2319 = vadd.f32 %v2318, %v1894
        %v2320 = vadd.f32 %v2319, %v1896
        %v2321 = vadd.f32 %v2320, %v1898
        %v2322 = vrot.slane %v2321, 4
        %v2323 = vadd.f32 %v2321, %v2322
        %v2324 = vrot.slane %v2323, 2
        %v2325 = vadd.f32 %v2323, %v2324
        %v2326 = vrot.slane %v2325, 1
        %v2327 = vadd.f32 %v2325, %v2326
        %v2328 = vadd.f32 %v1837, %v1839
        %v2329 = vadd.f32 %v2328, %v1841
        %v2330 = vadd.f32 %v2329, %v1843
        %v2331 = vadd.f32 %v2330, %v1845
        %v2332 = vadd.f32 %v2331, %v1847
        %v2333 = vadd.f32 %v2332, %v1849
        %v2334 = vadd.f32 %v2333, %v1851
        %v2335 = vadd.f32 %v2334, %v1853
        %v2336 = vadd.f32 %v2335, %v1855
        %v2337 = vadd.f32 %v2336, %v1857
        %v2338 = vadd.f32 %v2337, %v1859
        %v2339 = vadd.f32 %v2338, %v1861
        %v2340 = vadd.f32 %v2339, %v1863
        %v2341 = vadd.f32 %v2340, %v1865
        %v2342 = vadd.f32 %v2341, %v1867
        %v2343 = vadd.f32 %v2342, %v1869
        %v2344 = vadd.f32 %v2343, %v1871
        %v2345 = vadd.f32 %v2344, %v1873
        %v2346 = vadd.f32 %v2345, %v1875
        %v2347 = vadd.f32 %v2346, %v1877
        %v2348 = vadd.f32 %v2347, %v1879
        %v2349 = vadd.f32 %v2348, %v1881
        %v2350 = vadd.f32 %v2349, %v1883
        %v2351 = vadd.f32 %v2350, %v1885
        %v2352 = vadd.f32 %v2351, %v1887
        %v2353 = vadd.f32 %v2352, %v1889
        %v2354 = vadd.f32 %v2353, %v1891
        %v2355 = vadd.f32 %v2354, %v1893
        %v2356 = vadd.f32 %v2355, %v1895
        %v2357 = vadd.f32 %v2356, %v1897
        %v2358 = vadd.f32 %v2357, %v1899
        %v2359 = vrot.slane %v2358, 4
        %v2360 = vadd.f32 %v2358, %v2359
        %v2361 = vrot.slane %v2360, 2
        %v2362 = vadd.f32 %v2360, %v2361
        %v2363 = vrot.slane %v2362, 1
        %v2364 = vadd.f32 %v2362, %v2363
        %2365 = vst [vmem:[%s343] sm:$0xff] %v2327
        %2366 = vst [vmem:[%s343 + $0x8] sm:$0xff] %v2364
        %s2367 = sand.u32 %s126, 1
        %s2368 = scalar_lea.sflag [#allocation4], %s2367
        %s2369 = sand.u32 %s126, 1
        %s2370 = smul.addr %s2369, 256
        %s2371 = scalar_lea.vmem [#allocation8], %s2370
        %s2372 = smul.u32 32, %s29
        %p2373 = scmp.lt.s32.totalorder %s2372, 63
        %s2374 = scalar_select %p2373, %s2372, 63
        %s2375 = smul.addr %s2374, 8
        %s2376 = scalar_lea.vmem %s5, %s2375
        %s2377 = sand.u32 %s29, 1
        %s2378 = scalar_lea.sflag [#allocation10], %s2377
        %s2379 = sand.u32 %s178, 1
        %s2380 = smul.addr %s2379, 16
        %s2381 = scalar_lea.vmem [#allocation9], %s2380
        %s2382 = sand.u32 %s29, 1
        %s2383 = scalar_lea.sflag [#allocation10], %s2382
        %s2384 = sand.u32 %s204, 1
        %s2385 = smul.addr %s2384, 8
        %s2386 = scalar_lea.vmem [#allocation11], %s2385
        // Predicated region
        $region49: #{tpu_custom_call.1} parent=35 // pred_check
          %p2387 = pneg %p136
        $region50: #{tpu_custom_call.1} parent=35 // pred_check_branch
          %2389 = sbr.rel (%p2387) target = $region52
        $region51: #{tpu_custom_call.1} parent=35 // pred_region
          %s2390 = smul.u32 32, %s29
          %s2392 = ssub.s32 4096, 4096
          %2393 = vsyncadd %s2368, %s2392
          %s2394 = smul.addr %s2390, 128
          %s2395 = scalar_lea.hbm %s4, %s2394
          %s2396 = sshll.u32 %s2371, 4
          %s2397 = int_to_ptr.vmem [resolvable:$true] %s2396
          %2402 = dma.vmem_to_hbm [thread:$0]  %s2397, 4096, %s2395, %s2368, 128, 128, 8
        $region52: #{tpu_custom_call.1} parent=35 // pred_fallthru
          _
        // Predicated region
        $region53: #{tpu_custom_call.1} parent=35 // pred_check
          %p2403 = pneg %p162
        $region54: #{tpu_custom_call.1} parent=35 // pred_check_branch
          %2405 = sbr.rel (%p2403) target = $region56
        $region55: #{tpu_custom_call.1} parent=35 // pred_region
          %s2406 = smul.u32 32, %s29
        $region56: #{tpu_custom_call.1} parent=35 // pred_fallthru
          _
        // Predicated region
        $region57: #{tpu_custom_call.1} parent=35 // pred_check
          %p2407 = pneg %p188
        $region58: #{tpu_custom_call.1} parent=35 // pred_check_branch
          %2409 = sbr.rel (%p2407) target = $region60
        $region59: #{tpu_custom_call.1} parent=35 // pred_region
          %s2411 = ssub.s32 256, 256
          %2412 = vsyncadd %s2378, %s2411
          %s2413 = smul.addr %s29, 2
          %s2414 = smul.addr %s2413, 128
          %s2415 = scalar_lea.hbm %s6, %s2414
          %s2417 = sshll.u32 %s2381, 4
          %s2418 = int_to_ptr.vmem [resolvable:$true] %s2417
          %2420 = dma.vmem_to_hbm [thread:$0]  %s2418, 256, %s2415, %s2378
        $region60: #{tpu_custom_call.1} parent=35 // pred_fallthru
          _
        // Predicated region
        $region61: #{tpu_custom_call.1} parent=35 // pred_check
          %p2421 = pneg %p214
        $region62: #{tpu_custom_call.1} parent=35 // pred_check_branch
          %2423 = sbr.rel (%p2421) target = $region64
        $region63: #{tpu_custom_call.1} parent=35 // pred_region
          %s2425 = ssub.s32 128, 128
          %2426 = vsyncadd %s2383, %s2425
          %s2427 = smul.addr %s29, 128
          %s2428 = scalar_lea.hbm %s7, %s2427
          %s2430 = sshll.u32 %s2386, 4
          %s2431 = int_to_ptr.vmem [resolvable:$true] %s2430
          %2433 = dma.vmem_to_hbm [thread:$0]  %s2431, 128, %s2428, %s2383
        $region64: #{tpu_custom_call.1} parent=35 // pred_fallthru
          _
      $region36: #{tpu_custom_call.1} parent=5 // pred_fallthru
        _
      %p2434 = scmp.le.s32.totalorder 2, %s24
      // Predicated region
      $region65: #{tpu_custom_call.1} parent=5 // pred_check
        %p2435 = pneg %p2434
      $region66: #{tpu_custom_call.1} parent=5 // pred_check_branch
        %2437 = sbr.rel (%p2435) target = $region68
      $region67: #{tpu_custom_call.1} parent=5 // pred_region
        %s2438 = ssub.s32 %s24, 2
        // Predicated region
        $region69: #{tpu_custom_call.1} parent=67 // pred_check
          %p2439 = pneg %p142
        $region70: #{tpu_custom_call.1} parent=67 // pred_check_branch
          %2441 = sbr.rel (%p2439) target = $region72
        $region71: #{tpu_custom_call.1} parent=67 // pred_region
          %s2442 = sand.u32 %s127, 1
          %s2443 = scalar_lea.sflag [#allocation4], %s2442
          %s2444 = sand.u32 %s127, 1
          %s2445 = smul.addr %s2444, 256
          %s2446 = scalar_lea.vmem [#allocation8], %s2445
          %2447 = dma.done %s2443, 4096
        $region72: #{tpu_custom_call.1} parent=67 // pred_fallthru
          _
        // Predicated region
        $region73: #{tpu_custom_call.1} parent=67 // pred_check
          %p2448 = pneg %p168
        $region74: #{tpu_custom_call.1} parent=67 // pred_check_branch
          %2450 = sbr.rel (%p2448) target = $region76
        $region75: #{tpu_custom_call.1} parent=67 // pred_region
          %s2451 = smul.u32 32, %s30
          %p2452 = scmp.lt.s32.totalorder %s2451, 63
          %s2453 = scalar_select %p2452, %s2451, 63
          %s2454 = smul.addr %s2453, 8
          %s2455 = scalar_lea.vmem %s5, %s2454
        $region76: #{tpu_custom_call.1} parent=67 // pred_fallthru
          _
        // Predicated region
        $region77: #{tpu_custom_call.1} parent=67 // pred_check
          %p2456 = pneg %p194
        $region78: #{tpu_custom_call.1} parent=67 // pred_check_branch
          %2458 = sbr.rel (%p2456) target = $region80
        $region79: #{tpu_custom_call.1} parent=67 // pred_region
          %s2459 = sand.u32 %s30, 1
          %s2460 = scalar_lea.sflag [#allocation10], %s2459
          %s2461 = sand.u32 %s179, 1
          %s2462 = smul.addr %s2461, 16
          %s2463 = scalar_lea.vmem [#allocation9], %s2462
          %2464 = dma.done %s2460, 256
        $region80: #{tpu_custom_call.1} parent=67 // pred_fallthru
          _
        // Predicated region
        $region81: #{tpu_custom_call.1} parent=67 // pred_check
          %p2465 = pneg %p220
        $region82: #{tpu_custom_call.1} parent=67 // pred_check_branch
          %2467 = sbr.rel (%p2465) target = $region84
        $region83: #{tpu_custom_call.1} parent=67 // pred_region
          %s2468 = sand.u32 %s30, 1
          %s2469 = scalar_lea.sflag [#allocation10], %s2468
          %s2470 = sand.u32 %s205, 1
          %s2471 = smul.addr %s2470, 8
          %s2472 = scalar_lea.vmem [#allocation11], %s2471
          %2473 = dma.done %s2469, 128
        $region84: #{tpu_custom_call.1} parent=67 // pred_fallthru
          _
      $region68: #{tpu_custom_call.1} parent=5 // pred_fallthru
        _
    $region6: #{tpu_custom_call.1} parent=1 // loop_footer
      %s28 = sadd.s32 1, %s24
    $region7: #{tpu_custom_call.1} parent=1 // loop_footer_branch
      %23 = sbr.rel target = $region3
    $region8: #{tpu_custom_call.1} parent=1 // loop_exit
      _
    %2474 = vsyncpa [#allocation3], 1
    %s2475 = scalar_lea.sflag [#allocation3], 1
    %2476 = vsyncpa %s2475, 1
    %2477 = vsyncpa [#allocation6], 1
    %2478 = vsyncpa [#allocation4], 1
    %s2479 = scalar_lea.sflag [#allocation4], 1
    %2480 = vsyncpa %s2479, 1
    %2481 = vsyncpa [#allocation10], 1
    %s2482 = scalar_lea.sflag [#allocation10], 1
    %2483 = vsyncpa %s2482, 1

</llo_original>
